<compile_context>
chip_gen: v5e
topology: v5e:2x2
jax: 0.10.0
libtpu: 0.0.40
codegen_flags: <defaults>
</compile_context>

<pallas_src>
import math

import jax
import jax.numpy as jnp
from jax import lax
from jax.experimental import pallas as pl
from jax.experimental.pallas import tpu as pltpu


_BN_SCALE = 1.0 / math.sqrt(1.0 + 1e-5)   # eval BatchNorm1d, default stats
_LANE = 128


def _round_up(n, m):
    return ((n + m - 1) // m) * m


# ----------------------------------------------------------------------------
# Fused forward kernel (single pallas_call, everything VMEM-resident)
# ----------------------------------------------------------------------------

def _make_fused_kernel(nhidlayer, nhid_true, nclass_true, hpad, cpad):
    neg_inf_attn = -1000000000.0          # masked_fill(mask > 0, -1e9)
    neg_inf_dec = -9000000000000000.0     # zero_vec in the decoder masking
    inv_sqrt_dk = 1.0 / math.sqrt(nhid_true)
    bf16 = jnp.bfloat16

    def kernel(*refs):
        it = iter(refs)
        fea_ref = next(it)
        adj_ref = next(it)
        w_in_ref = next(it); b_in_ref = next(it)      # ingc  (fpad, 2*hpad)
        b_mu_ref = next(it)                           # shared mu bias (1, hpad)
        w_lv_ref = next(it); b_lv_ref = next(it)      # logvar (hpad, 2*hpad)
        w_out_ref = next(it); b_out_ref = next(it)    # outgc (hpad, 2*cpad)
        xcons = [(next(it), next(it), next(it))       # (Wbig, Wfea, bkq)
                 for _ in range(nhidlayer + 1)]
        mid = [(next(it), next(it))                   # (Wcat, b)
               for _ in range(nhidlayer)]
        adj_con_ref = next(it)
        packed_ref = next(it)                         # (N, 3*hpad) lane-dense

        adj = adj_ref[...]                            # f32: masks/comparisons
        adj_bf = adj.astype(bf16)                     # bf16 MXU operand
        adj_pos = adj > 0.0
        fea = fea_ref[...]
        fea_bf = fea.astype(bf16)
        flag_adj = jnp.where(adj_pos, 1.0, adj)       # adj.masked_fill(adj>0, 1)

        # ---- fused building blocks (all VMEM-resident, bf16 MXU / f32 acc) --
        def dotf(a, b):
            return jnp.dot(a, b, preferred_element_type=jnp.float32)

        def dot_t(a, b):      # a @ b.T without an explicit XLU transpose
            return lax.dot_general(a, b, (((1,), (1,)), ((), ())),
                                   preferred_element_type=jnp.float32)

        def gcn(x, w_ref, b_ref):
            # adj @ (x@W) + x@W_self + b ; W|W_self concatenated at init.
            # hout is a multiple of 128 -> both splits are free tile views.
            both = dotf(x.astype(bf16), w_ref[...])
            hout = both.shape[1] // 2
            return (dotf(adj_bf, both[:, :hout].astype(bf16))
                    + both[:, hout:] + b_ref[...])

        def softmax_exact(logits):        # adj_con path (feeds floor)
            m = jnp.max(logits, axis=1, keepdims=True)
            p = jnp.exp(logits - m)
            return p / jnp.sum(p, axis=1, keepdims=True)

        def softmax_fast(logits):         # attention path (approx recip OK)
            m = jnp.max(logits, axis=1, keepdims=True)
            p = jnp.exp(logits - m)
            return p * pl.reciprocal(jnp.sum(p, axis=1, keepdims=True),
                                     approx=True)

        def attention(q_like, k_like, mask):
            # PyTorch call order: attention(query=key_proj_out,
            #                               key=query_proj_out,
            #                               value=key_proj_out)
            qb = q_like.astype(bf16)
            kb = k_like.astype(bf16)
            scores = dot_t(qb, kb) * inv_sqrt_dk
            scores = jnp.where(mask > 0.0, neg_inf_attn, scores)
            return dotf(softmax_fast(scores).astype(bf16), qb)

        def masked_decoder(z):            # InnerProductDecoder (identity act)
            zb = z.astype(bf16)
            return jnp.where(adj_pos, dot_t(zb, zb), neg_inf_dec)

        def x_consumers(x, wbig_ref, wfea_ref, bkq_ref):
            # One wide MXU pass for all consumers of x:
            #   Wbig = [W_mu | Wself_mu | Wk_x | Wq]  (hpad, 4*hpad)
            # All result splits are at 128-lane tile boundaries (free views).
            big = dotf(x.astype(bf16), wbig_ref[...])
            mu = (dotf(adj_bf, big[:, :hpad].astype(bf16))
                  + big[:, hpad:2 * hpad] + b_mu_ref[...])
            kq = big[:, 2 * hpad:] + bkq_ref[...]
            key = kq[:, :hpad] + dotf(fea_bf, wfea_ref[...])
            query = kq[:, hpad:]
            return mu, key, query

        # ------------------------------- forward -----------------------------
        x = gcn(fea, w_in_ref, b_in_ref)              # dropout: no-op (eval)
        mu, key, query = x_consumers(x, *xcons[0])
        adj_con = softmax_exact(masked_decoder(mu))   # z = mu (eval reparam.)
        val = attention(key, query, adj)
        val_in = val + x
        mask = flag_adj

        for i in range(nhidlayer):
            # walk-count power: keep operands f32 (bf16 would round counts)
            mask = mask + jnp.dot(mask, flag_adj,
                                  preferred_element_type=jnp.float32)
            x = gcn(val_in, *mid[i])
            mu, key, query = x_consumers(x, *xcons[i + 1])
            adj_con = softmax_exact(adj_con + masked_decoder(mu))
            val = val + attention(key, query, mask)
            # dropout(0.2): no-op in eval; MFB signed-sqrt + L2 normalize
            s = (jnp.sqrt(jnp.maximum(val, 0.0))
                 - jnp.sqrt(jnp.maximum(-val, 0.0)))
            nsq = jnp.sum(s * s, axis=1, keepdims=True)
            val = s * lax.rsqrt(jnp.maximum(nsq, 1e-24))   # F.normalize eps
            val_in = val + x

        # logvar only matters via the return value -> compute once from final x
        logvar = gcn(x, w_lv_ref, b_lv_ref)

        out = gcn(val_in, w_out_ref, b_out_ref)        # (N, cpad) padded logits
        lane = lax.broadcasted_iota(jnp.int32, out.shape, 1)
        valid = lane < nclass_true
        masked_out = jnp.where(valid, out, -1e30)      # pad lanes excluded
        m = jnp.max(masked_out, axis=1, keepdims=True)
        lse = m + jnp.log(jnp.sum(jnp.exp(masked_out - m), axis=1,
                                  keepdims=True))
        logp = out - lse                               # wrapper slices :nclass

        # adj_con path uses exact divide (floor is integer-boundary sensitive)
        adj_con_ref[...] = jnp.floor(adj_con / float(nhidlayer + 1))

        # Lane-dense packed epilogue: 128-lane-aligned unmasked stores into one
        # (N, 3*hpad) slab — no sub-128 masked vst.msk partial stores.
        packed_ref[:, 0:hpad] = mu
        packed_ref[:, hpad:2 * hpad] = logvar
        packed_ref[:, 2 * hpad:3 * hpad] = logp

    return kernel


# ----------------------------------------------------------------------------
# Parameter initialization (PyTorch-shaped, zero-padded to 128 lanes,
# eval-BN affine folded, weights stored bf16 for the MXU)
# ----------------------------------------------------------------------------

def _uniform(key, shape, bound):
    return jax.random.uniform(key, shape, jnp.float32, -bound, bound)


def _pad2(w, rows, cols):
    out = jnp.zeros((rows, cols), jnp.float32)
    return out.at[:w.shape[0], :w.shape[1]].set(w)


def init_model_params(key, nfeat, nhid, nclass, nhidlayer):
    fpad = _round_up(nfeat, _LANE)
    hpad = _round_up(nhid, _LANE)
    cpad = _round_up(nclass, _LANE)

    keys = jax.random.split(key, 5 + 2 * nhidlayer)
    kin, kmu, klv, kout = keys[0], keys[1], keys[2], keys[3]
    k_kq = [keys[4 + i] for i in range(nhidlayer + 1)]
    k_mid = [keys[4 + (nhidlayer + 1) + i] for i in range(nhidlayer)]

    def gcn_pieces(k, fin, fout, fin_pad, fout_pad):
        k1, k2, k3 = jax.random.split(k, 3)
        stdv = 1.0 / math.sqrt(fout)
        w = _uniform(k1, (fin, fout), stdv) * _BN_SCALE
        wself = _uniform(k2, (fin, fout), stdv) * _BN_SCALE
        b = _uniform(k3, (1, fout), stdv) * _BN_SCALE
        return (_pad2(w, fin_pad, fout_pad),
                _pad2(wself, fin_pad, fout_pad),
                _pad2(b, 1, fout_pad))

    def gcn_dict(pieces):
        w, wself, b = pieces
        return dict(
            Wcat=jnp.concatenate([w, wself], axis=1).astype(jnp.bfloat16),
            b=b)

    in_pieces = gcn_pieces(kin, nfeat, nhid, fpad, hpad)
    mu_pieces = gcn_pieces(kmu, nhid, nhid, hpad, hpad)
    lv_pieces = gcn_pieces(klv, nhid, nhid, hpad, hpad)
    out_pieces = gcn_pieces(kout, nhid, nclass, hpad, cpad)
    mu_w, mu_wself, mu_b = mu_pieces

    def attn_xcons(k):
        # key_proj: Linear(nhid+nfeat, nhid); query_proj: Linear(nhid, nhid).
        kk1, kk2, kq1, kq2 = jax.random.split(k, 4)
        fin_k = nhid + nfeat
        bk_bound = 1.0 / math.sqrt(fin_k)
        wk = _uniform(kk1, (fin_k, nhid), bk_bound)
        bk = _uniform(kk2, (1, nhid), bk_bound)
        bq_bound = 1.0 / math.sqrt(nhid)
        wq = _uniform(kq1, (nhid, nhid), bq_bound)
        bq = _uniform(kq2, (1, nhid), bq_bound)
        # Batch all x-consumers (shared mu GCN + key/query) into one weight;
        # split the key weight so the [x, fea] concat never materializes.
        wbig = jnp.concatenate(
            [mu_w, mu_wself,
             _pad2(wk[:nhid], hpad, hpad),
             _pad2(wq, hpad, hpad)], axis=1).astype(jnp.bfloat16)  # (hpad,4*hpad)
        wfea = _pad2(wk[nhid:], fpad, hpad).astype(jnp.bfloat16)
        bkq = jnp.concatenate([_pad2(bk, 1, hpad), _pad2(bq, 1, hpad)], axis=1)
        return dict(Wbig=wbig, Wfea=wfea, bkq=bkq)

    return dict(
        ingc=gcn_dict(in_pieces),
        b_mu=mu_b,
        logvar=gcn_dict(lv_pieces),
        outgc=gcn_dict(out_pieces),
        xcons=[attn_xcons(k_kq[i]) for i in range(nhidlayer + 1)],
        mid=[gcn_dict(gcn_pieces(k_mid[i], nhid, nhid, hpad, hpad))
             for i in range(nhidlayer)],
    )
    # node_regen / PairNorm params are not created: unused on the eval path.


def _flatten_params(params, nhidlayer):
    flat = [params["ingc"]["Wcat"], params["ingc"]["b"],
            params["b_mu"],
            params["logvar"]["Wcat"], params["logvar"]["b"],
            params["outgc"]["Wcat"], params["outgc"]["b"]]
    for i in range(nhidlayer + 1):
        xc = params["xcons"][i]
        flat += [xc["Wbig"], xc["Wfea"], xc["bkq"]]
    for i in range(nhidlayer):
        flat += [params["mid"][i]["Wcat"], params["mid"][i]["b"]]
    return flat


# ----------------------------------------------------------------------------
# pallas_call plumbing: one fused call for the whole forward pass
# ----------------------------------------------------------------------------

def _vmem_limit_bytes():
    # Per-generation VMEM budget with headroom below physical capacity
    # (128 MiB on v5e/v6e, 64 MiB per TensorCore on v7x).
    try:
        cap = int(pltpu.get_tpu_info().vmem_capacity_bytes)
    except Exception:
        cap = 64 * 1024 * 1024
    return max(32 * 1024 * 1024, min(cap - 16 * 1024 * 1024, 100 * 1024 * 1024))


def make_gcn_forward(nhidlayer, n, nfeat, nhid, nclass):
    assert n % 8 == 0, "node count must be a multiple of 8 (sublane tile)"
    fpad = _round_up(nfeat, _LANE)
    hpad = _round_up(nhid, _LANE)
    cpad = _round_up(nclass, _LANE)

    kernel = _make_fused_kernel(nhidlayer, nhid, nclass, hpad, cpad)

    out_shape = (
        jax.ShapeDtypeStruct((n, n), jnp.float32),          # adj_con // (L+1)
        jax.ShapeDtypeStruct((n, 3 * hpad), jnp.float32),   # mu|logvar|logp slab
    )

    # Advisory cost estimate so XLA schedules around the fused custom call.
    def mm(m, k, nn):
        return 2 * m * k * nn
    gcn_hidden = mm(n, hpad, 2 * hpad) + mm(n, n, hpad)
    gcn_in = mm(n, fpad, 2 * hpad) + mm(n, n, hpad)
    gcn_out = mm(n, hpad, 2 * cpad) + mm(n, n, cpad)
    xcons_fl = mm(n, hpad, 4 * hpad) + mm(n, n, hpad) + mm(n, fpad, hpad)
    attn_fl = 2 * mm(n, n, hpad)
    dec_fl = mm(n, n, hpad)
    flops = (gcn_in + xcons_fl + attn_fl + dec_fl
             + nhidlayer * (gcn_hidden + xcons_fl + attn_fl + dec_fl
                            + mm(n, n, n))
             + gcn_hidden + gcn_out)
    transcendentals = 2 * (nhidlayer + 1) * n * n + n * cpad
    weight_bytes = (
        (fpad * 2 * hpad) * 2 + hpad * 4                       # ingc
        + hpad * 4                                             # shared mu bias
        + (hpad * 2 * hpad) * 2 + hpad * 4                     # logvar
        + (hpad * 2 * cpad) * 2 + cpad * 4                     # outgc
        + (nhidlayer + 1) * ((hpad * 4 * hpad) * 2
                             + (fpad * hpad) * 2 + 2 * hpad * 4)
        + nhidlayer * ((hpad * 2 * hpad) * 2 + hpad * 4))
    io_bytes = 4 * (n * fpad + 2 * n * n + n * 3 * hpad)
    cost = pl.CostEstimate(flops=flops, transcendentals=transcendentals,
                           bytes_accessed=weight_bytes + io_bytes)

    call = pl.pallas_call(
        kernel,
        out_shape=out_shape,
        compiler_params=pltpu.CompilerParams(
            vmem_limit_bytes=_vmem_limit_bytes()),
        cost_estimate=cost,
    )

    @jax.jit
    def forward(params, fea, adj):
        fea_p = jnp.zeros((n, fpad), jnp.float32).at[:, :nfeat].set(fea)
        adj_con, packed = call(fea_p, adj, *_flatten_params(params, nhidlayer))
        mu = packed[:, :nhid]
        logvar = packed[:, hpad:hpad + nhid]
        logp = packed[:, 2 * hpad:2 * hpad + nclass]
        return adj_con, mu, logvar, logp

    return forward


# ----------------------------------------------------------------------------
# Demo
# ----------------------------------------------------------------------------

if __name__ == "__main__":
    N = 32          # number of graph nodes
    NFEAT = 16
    NHID = 32
    NCLASS = 8
    NHIDLAYER = 1

    root = jax.random.PRNGKey(0)
    k_params, k_fea, k_adj = jax.random.split(root, 3)

    params = init_model_params(k_params, NFEAT, NHID, NCLASS, NHIDLAYER)

    fea = jax.random.normal(k_fea, (N, NFEAT), jnp.float32)
    # Sparse-ish symmetric adjacency (with self loops), row-normalized.
    a = (jax.random.uniform(k_adj, (N, N), jnp.float32) > 0.7).astype(jnp.float32)
    adj = ((a + a.T) > 0).astype(jnp.float32)
    adj = adj + jnp.eye(N, dtype=jnp.float32)
    deg = jnp.sum(adj, axis=1, keepdims=True)
    adj = adj / jnp.maximum(deg, 1.0)

    forward = make_gcn_forward(NHIDLAYER, N, NFEAT, NHID, NCLASS)
    adj_con, mu, logvar, logp = forward(params, fea, adj)
    jax.block_until_ready((adj_con, mu, logvar, logp))

    assert adj_con.shape == (N, N)
    assert mu.shape == (N, NHID)
    assert logvar.shape == (N, NHID)
    assert logp.shape == (N, NCLASS)
    assert bool(jnp.all(jnp.isfinite(adj_con)))
    assert bool(jnp.all(jnp.isfinite(mu)))
    assert bool(jnp.all(jnp.isfinite(logvar)))
    assert bool(jnp.all(jnp.isfinite(logp)))
    # TODO(synk): training-mode dropout / reparameterization noise / BN batch
    # statistics are not modeled (eval-mode semantics implemented).
    print("KERNEL_OK")
</pallas_src>

<mosaic_0001>
module attributes {stable_mosaic.version = 11 : i64} {
  func.func @kernel(%arg0: memref<32x128xf32, #tpu.memory_space<vmem>>, %arg1: memref<32x32xf32, #tpu.memory_space<vmem>>, %arg2: memref<128x256xbf16, #tpu.memory_space<vmem>>, %arg3: memref<1x128xf32, #tpu.memory_space<vmem>>, %arg4: memref<1x128xf32, #tpu.memory_space<vmem>>, %arg5: memref<128x256xbf16, #tpu.memory_space<vmem>>, %arg6: memref<1x128xf32, #tpu.memory_space<vmem>>, %arg7: memref<128x256xbf16, #tpu.memory_space<vmem>>, %arg8: memref<1x128xf32, #tpu.memory_space<vmem>>, %arg9: memref<128x512xbf16, #tpu.memory_space<vmem>>, %arg10: memref<128x128xbf16, #tpu.memory_space<vmem>>, %arg11: memref<1x256xf32, #tpu.memory_space<vmem>>, %arg12: memref<128x512xbf16, #tpu.memory_space<vmem>>, %arg13: memref<128x128xbf16, #tpu.memory_space<vmem>>, %arg14: memref<1x256xf32, #tpu.memory_space<vmem>>, %arg15: memref<128x256xbf16, #tpu.memory_space<vmem>>, %arg16: memref<1x128xf32, #tpu.memory_space<vmem>>, %arg17: memref<32x32xf32, #tpu.memory_space<vmem>>, %arg18: memref<32x384xf32, #tpu.memory_space<vmem>>) attributes {dimension_semantics = [], scalar_prefetch = 0 : i64, scratch_operands = 0 : i64, tpu.core_type = #tpu.core_type<tc>} {
    %c0 = arith.constant 0 : index
    %c0_0 = arith.constant 0 : index
    %0 = vector.load %arg1[%c0, %c0_0] : memref<32x32xf32, #tpu.memory_space<vmem>>, vector<32x32xf32>
    %1 = arith.truncf %0 : vector<32x32xf32> to vector<32x32xbf16>
    %cst = arith.constant 0.000000e+00 : f32
    %2 = vector.broadcast %cst : f32 to vector<32x32xf32>
    %3 = arith.cmpf ogt, %0, %2 : vector<32x32xf32>
    %c0_1 = arith.constant 0 : index
    %c0_2 = arith.constant 0 : index
    %4 = vector.load %arg0[%c0_1, %c0_2] : memref<32x128xf32, #tpu.memory_space<vmem>>, vector<32x128xf32>
    %5 = arith.truncf %4 : vector<32x128xf32> to vector<32x128xbf16>
    %cst_3 = arith.constant 1.000000e+00 : f32
    %6 = vector.broadcast %cst_3 : f32 to vector<32x32xf32>
    %7 = arith.select %3, %6, %0 : vector<32x32xi1>, vector<32x32xf32>
    %8 = arith.truncf %4 : vector<32x128xf32> to vector<32x128xbf16>
    %c0_4 = arith.constant 0 : index
    %c0_5 = arith.constant 0 : index
    %9 = vector.load %arg2[%c0_4, %c0_5] : memref<128x256xbf16, #tpu.memory_space<vmem>>, vector<128x256xbf16>
    %cst_6 = arith.constant dense<0.000000e+00> : vector<32x256xf32>
    %10 = tpu.matmul %8, %9, %cst_6 {dimension_numbers = #tpu.dot_dimension_numbers<[1], [0], [0], [1], [0, 0, 1, 1], [], []>} : vector<32x128xbf16>, vector<128x256xbf16>, vector<32x256xf32> -> vector<32x256xf32>
    %11 = vector.extract_strided_slice %10 {offsets = [0, 0], sizes = [32, 128], strides = [1, 1]} : vector<32x256xf32> to vector<32x128xf32>
    %12 = arith.truncf %11 : vector<32x128xf32> to vector<32x128xbf16>
    %cst_7 = arith.constant dense<0.000000e+00> : vector<32x128xf32>
    %13 = tpu.matmul %1, %12, %cst_7 {dimension_numbers = #tpu.dot_dimension_numbers<[1], [0], [0], [1], [0, 0, 1, 1], [], []>} : vector<32x32xbf16>, vector<32x128xbf16>, vector<32x128xf32> -> vector<32x128xf32>
    %14 = vector.extract_strided_slice %10 {offsets = [0, 128], sizes = [32, 128], strides = [1, 1]} : vector<32x256xf32> to vector<32x128xf32>
    %15 = arith.addf %13, %14 : vector<32x128xf32>
    %c0_8 = arith.constant 0 : index
    %c0_9 = arith.constant 0 : index
    %16 = vector.load %arg3[%c0_8, %c0_9] : memref<1x128xf32, #tpu.memory_space<vmem>>, vector<1x128xf32>
    %17 = vector.broadcast %16 : vector<1x128xf32> to vector<32x128xf32>
    %18 = arith.addf %15, %17 : vector<32x128xf32>
    %19 = arith.truncf %18 : vector<32x128xf32> to vector<32x128xbf16>
    %c0_10 = arith.constant 0 : index
    %c0_11 = arith.constant 0 : index
    %20 = vector.load %arg9[%c0_10, %c0_11] : memref<128x512xbf16, #tpu.memory_space<vmem>>, vector<128x512xbf16>
    %cst_12 = arith.constant dense<0.000000e+00> : vector<32x512xf32>
    %21 = tpu.matmul %19, %20, %cst_12 {dimension_numbers = #tpu.dot_dimension_numbers<[1], [0], [0], [1], [0, 0, 1, 1], [], []>} : vector<32x128xbf16>, vector<128x512xbf16>, vector<32x512xf32> -> vector<32x512xf32>
    %22 = vector.extract_strided_slice %21 {offsets = [0, 0], sizes = [32, 128], strides = [1, 1]} : vector<32x512xf32> to vector<32x128xf32>
    %23 = arith.truncf %22 : vector<32x128xf32> to vector<32x128xbf16>
    %cst_13 = arith.constant dense<0.000000e+00> : vector<32x128xf32>
    %24 = tpu.matmul %1, %23, %cst_13 {dimension_numbers = #tpu.dot_dimension_numbers<[1], [0], [0], [1], [0, 0, 1, 1], [], []>} : vector<32x32xbf16>, vector<32x128xbf16>, vector<32x128xf32> -> vector<32x128xf32>
    %25 = vector.extract_strided_slice %21 {offsets = [0, 128], sizes = [32, 128], strides = [1, 1]} : vector<32x512xf32> to vector<32x128xf32>
    %26 = arith.addf %24, %25 : vector<32x128xf32>
    %c0_14 = arith.constant 0 : index
    %c0_15 = arith.constant 0 : index
    %27 = vector.load %arg4[%c0_14, %c0_15] : memref<1x128xf32, #tpu.memory_space<vmem>>, vector<1x128xf32>
    %28 = vector.broadcast %27 : vector<1x128xf32> to vector<32x128xf32>
    %29 = arith.addf %26, %28 : vector<32x128xf32>
    %30 = vector.extract_strided_slice %21 {offsets = [0, 256], sizes = [32, 256], strides = [1, 1]} : vector<32x512xf32> to vector<32x256xf32>
    %c0_16 = arith.constant 0 : index
    %c0_17 = arith.constant 0 : index
    %31 = vector.load %arg11[%c0_16, %c0_17] : memref<1x256xf32, #tpu.memory_space<vmem>>, vector<1x256xf32>
    %32 = vector.broadcast %31 : vector<1x256xf32> to vector<32x256xf32>
    %33 = arith.addf %30, %32 : vector<32x256xf32>
    %34 = vector.extract_strided_slice %33 {offsets = [0, 0], sizes = [32, 128], strides = [1, 1]} : vector<32x256xf32> to vector<32x128xf32>
    %c0_18 = arith.constant 0 : index
    %c0_19 = arith.constant 0 : index
    %35 = vector.load %arg10[%c0_18, %c0_19] : memref<128x128xbf16, #tpu.memory_space<vmem>>, vector<128x128xbf16>
    %cst_20 = arith.constant dense<0.000000e+00> : vector<32x128xf32>
    %36 = tpu.matmul %5, %35, %cst_20 {dimension_numbers = #tpu.dot_dimension_numbers<[1], [0], [0], [1], [0, 0, 1, 1], [], []>} : vector<32x128xbf16>, vector<128x128xbf16>, vector<32x128xf32> -> vector<32x128xf32>
    %37 = arith.addf %34, %36 : vector<32x128xf32>
    %38 = vector.extract_strided_slice %33 {offsets = [0, 128], sizes = [32, 128], strides = [1, 1]} : vector<32x256xf32> to vector<32x128xf32>
    %39 = arith.truncf %29 : vector<32x128xf32> to vector<32x128xbf16>
    %cst_21 = arith.constant dense<0.000000e+00> : vector<32x32xf32>
    %40 = tpu.matmul %39, %39, %cst_21 {dimension_numbers = #tpu.dot_dimension_numbers<[1], [1], [0], [0], [0, 0, 1, 0], [], []>} : vector<32x128xbf16>, vector<32x128xbf16>, vector<32x32xf32> -> vector<32x32xf32>
    %cst_22 = arith.constant -9.000000e+15 : f32
    %41 = vector.broadcast %cst_22 : f32 to vector<32x32xf32>
    %42 = arith.select %3, %40, %41 : vector<32x32xi1>, vector<32x32xf32>
    %cst_23 = arith.constant dense<0xFF800000> : vector<32xf32>
    %43 = vector.multi_reduction <maximumf>, %42, %cst_23 [1] : vector<32x32xf32> to vector<32xf32>
    %44 = vector.shape_cast %43 : vector<32xf32> to vector<32x1xf32>
    %45 = vector.broadcast %44 : vector<32x1xf32> to vector<32x32xf32>
    %46 = arith.subf %42, %45 : vector<32x32xf32>
    %47 = math.exp %46 : vector<32x32xf32>
    %cst_24 = arith.constant dense<0.000000e+00> : vector<32xf32>
    %48 = vector.multi_reduction <add>, %47, %cst_24 [1] : vector<32x32xf32> to vector<32xf32>
    %49 = vector.shape_cast %48 : vector<32xf32> to vector<32x1xf32>
    %50 = vector.broadcast %49 : vector<32x1xf32> to vector<32x32xf32>
    %51 = arith.divf %47, %50 : vector<32x32xf32>
    %52 = arith.truncf %37 : vector<32x128xf32> to vector<32x128xbf16>
    %53 = arith.truncf %38 : vector<32x128xf32> to vector<32x128xbf16>
    %cst_25 = arith.constant dense<0.000000e+00> : vector<32x32xf32>
    %54 = tpu.matmul %52, %53, %cst_25 {dimension_numbers = #tpu.dot_dimension_numbers<[1], [1], [0], [0], [0, 0, 1, 0], [], []>} : vector<32x128xbf16>, vector<32x128xbf16>, vector<32x32xf32> -> vector<32x32xf32>
    %cst_26 = arith.constant 0.176776692 : f32
    %55 = vector.broadcast %cst_26 : f32 to vector<32x32xf32>
    %56 = arith.mulf %54, %55 : vector<32x32xf32>
    %cst_27 = arith.constant 0.000000e+00 : f32
    %57 = vector.broadcast %cst_27 : f32 to vector<32x32xf32>
    %58 = arith.cmpf ogt, %0, %57 : vector<32x32xf32>
    %cst_28 = arith.constant -1.000000e+09 : f32
    %59 = vector.broadcast %cst_28 : f32 to vector<32x32xf32>
    %60 = arith.select %58, %59, %56 : vector<32x32xi1>, vector<32x32xf32>
    %cst_29 = arith.constant dense<0xFF800000> : vector<32xf32>
    %61 = vector.multi_reduction <maximumf>, %60, %cst_29 [1] : vector<32x32xf32> to vector<32xf32>
    %62 = vector.shape_cast %61 : vector<32xf32> to vector<32x1xf32>
    %63 = vector.broadcast %62 : vector<32x1xf32> to vector<32x32xf32>
    %64 = arith.subf %60, %63 : vector<32x32xf32>
    %65 = math.exp %64 : vector<32x32xf32>
    %cst_30 = arith.constant dense<0.000000e+00> : vector<32xf32>
    %66 = vector.multi_reduction <add>, %65, %cst_30 [1] : vector<32x32xf32> to vector<32xf32>
    %67 = vector.shape_cast %66 : vector<32xf32> to vector<32x1xf32>
    %68 = tpu.reciprocal %67 {approx = true} : vector<32x1xf32> -> vector<32x1xf32>
    %69 = vector.broadcast %68 : vector<32x1xf32> to vector<32x32xf32>
    %70 = arith.mulf %65, %69 : vector<32x32xf32>
    %71 = arith.truncf %70 : vector<32x32xf32> to vector<32x32xbf16>
    %cst_31 = arith.constant dense<0.000000e+00> : vector<32x128xf32>
    %72 = tpu.matmul %71, %52, %cst_31 {dimension_numbers = #tpu.dot_dimension_numbers<[1], [0], [0], [1], [0, 0, 1, 1], [], []>} : vector<32x32xbf16>, vector<32x128xbf16>, vector<32x128xf32> -> vector<32x128xf32>
    %73 = arith.addf %72, %18 : vector<32x128xf32>
    %cst_32 = arith.constant dense<0.000000e+00> : vector<32x32xf32>
    %74 = tpu.matmul %7, %7, %cst_32 {dimension_numbers = #tpu.dot_dimension_numbers<[1], [0], [0], [1], [0, 0, 1, 1], [], []>} : vector<32x32xf32>, vector<32x32xf32>, vector<32x32xf32> -> vector<32x32xf32>
    %75 = arith.addf %7, %74 : vector<32x32xf32>
    %76 = arith.truncf %73 : vector<32x128xf32> to vector<32x128xbf16>
    %c0_33 = arith.constant 0 : index
    %c0_34 = arith.constant 0 : index
    %77 = vector.load %arg15[%c0_33, %c0_34] : memref<128x256xbf16, #tpu.memory_space<vmem>>, vector<128x256xbf16>
    %cst_35 = arith.constant dense<0.000000e+00> : vector<32x256xf32>
    %78 = tpu.matmul %76, %77, %cst_35 {dimension_numbers = #tpu.dot_dimension_numbers<[1], [0], [0], [1], [0, 0, 1, 1], [], []>} : vector<32x128xbf16>, vector<128x256xbf16>, vector<32x256xf32> -> vector<32x256xf32>
    %79 = vector.extract_strided_slice %78 {offsets = [0, 0], sizes = [32, 128], strides = [1, 1]} : vector<32x256xf32> to vector<32x128xf32>
    %80 = arith.truncf %79 : vector<32x128xf32> to vector<32x128xbf16>
    %cst_36 = arith.constant dense<0.000000e+00> : vector<32x128xf32>
    %81 = tpu.matmul %1, %80, %cst_36 {dimension_numbers = #tpu.dot_dimension_numbers<[1], [0], [0], [1], [0, 0, 1, 1], [], []>} : vector<32x32xbf16>, vector<32x128xbf16>, vector<32x128xf32> -> vector<32x128xf32>
    %82 = vector.extract_strided_slice %78 {offsets = [0, 128], sizes = [32, 128], strides = [1, 1]} : vector<32x256xf32> to vector<32x128xf32>
    %83 = arith.addf %81, %82 : vector<32x128xf32>
    %c0_37 = arith.constant 0 : index
    %c0_38 = arith.constant 0 : index
    %84 = vector.load %arg16[%c0_37, %c0_38] : memref<1x128xf32, #tpu.memory_space<vmem>>, vector<1x128xf32>
    %85 = vector.broadcast %84 : vector<1x128xf32> to vector<32x128xf32>
    %86 = arith.addf %83, %85 : vector<32x128xf32>
    %87 = arith.truncf %86 : vector<32x128xf32> to vector<32x128xbf16>
    %c0_39 = arith.constant 0 : index
    %c0_40 = arith.constant 0 : index
    %88 = vector.load %arg12[%c0_39, %c0_40] : memref<128x512xbf16, #tpu.memory_space<vmem>>, vector<128x512xbf16>
    %cst_41 = arith.constant dense<0.000000e+00> : vector<32x512xf32>
    %89 = tpu.matmul %87, %88, %cst_41 {dimension_numbers = #tpu.dot_dimension_numbers<[1], [0], [0], [1], [0, 0, 1, 1], [], []>} : vector<32x128xbf16>, vector<128x512xbf16>, vector<32x512xf32> -> vector<32x512xf32>
    %90 = vector.extract_strided_slice %89 {offsets = [0, 0], sizes = [32, 128], strides = [1, 1]} : vector<32x512xf32> to vector<32x128xf32>
    %91 = arith.truncf %90 : vector<32x128xf32> to vector<32x128xbf16>
    %cst_42 = arith.constant dense<0.000000e+00> : vector<32x128xf32>
    %92 = tpu.matmul %1, %91, %cst_42 {dimension_numbers = #tpu.dot_dimension_numbers<[1], [0], [0], [1], [0, 0, 1, 1], [], []>} : vector<32x32xbf16>, vector<32x128xbf16>, vector<32x128xf32> -> vector<32x128xf32>
    %93 = vector.extract_strided_slice %89 {offsets = [0, 128], sizes = [32, 128], strides = [1, 1]} : vector<32x512xf32> to vector<32x128xf32>
    %94 = arith.addf %92, %93 : vector<32x128xf32>
    %c0_43 = arith.constant 0 : index
    %c0_44 = arith.constant 0 : index
    %95 = vector.load %arg4[%c0_43, %c0_44] : memref<1x128xf32, #tpu.memory_space<vmem>>, vector<1x128xf32>
    %96 = vector.broadcast %95 : vector<1x128xf32> to vector<32x128xf32>
    %97 = arith.addf %94, %96 : vector<32x128xf32>
    %98 = vector.extract_strided_slice %89 {offsets = [0, 256], sizes = [32, 256], strides = [1, 1]} : vector<32x512xf32> to vector<32x256xf32>
    %c0_45 = arith.constant 0 : index
    %c0_46 = arith.constant 0 : index
    %99 = vector.load %arg14[%c0_45, %c0_46] : memref<1x256xf32, #tpu.memory_space<vmem>>, vector<1x256xf32>
    %100 = vector.broadcast %99 : vector<1x256xf32> to vector<32x256xf32>
    %101 = arith.addf %98, %100 : vector<32x256xf32>
    %102 = vector.extract_strided_slice %101 {offsets = [0, 0], sizes = [32, 128], strides = [1, 1]} : vector<32x256xf32> to vector<32x128xf32>
    %c0_47 = arith.constant 0 : index
    %c0_48 = arith.constant 0 : index
    %103 = vector.load %arg13[%c0_47, %c0_48] : memref<128x128xbf16, #tpu.memory_space<vmem>>, vector<128x128xbf16>
    %cst_49 = arith.constant dense<0.000000e+00> : vector<32x128xf32>
    %104 = tpu.matmul %5, %103, %cst_49 {dimension_numbers = #tpu.dot_dimension_numbers<[1], [0], [0], [1], [0, 0, 1, 1], [], []>} : vector<32x128xbf16>, vector<128x128xbf16>, vector<32x128xf32> -> vector<32x128xf32>
    %105 = arith.addf %102, %104 : vector<32x128xf32>
    %106 = vector.extract_strided_slice %101 {offsets = [0, 128], sizes = [32, 128], strides = [1, 1]} : vector<32x256xf32> to vector<32x128xf32>
    %107 = arith.truncf %97 : vector<32x128xf32> to vector<32x128xbf16>
    %cst_50 = arith.constant dense<0.000000e+00> : vector<32x32xf32>
    %108 = tpu.matmul %107, %107, %cst_50 {dimension_numbers = #tpu.dot_dimension_numbers<[1], [1], [0], [0], [0, 0, 1, 0], [], []>} : vector<32x128xbf16>, vector<32x128xbf16>, vector<32x32xf32> -> vector<32x32xf32>
    %cst_51 = arith.constant -9.000000e+15 : f32
    %109 = vector.broadcast %cst_51 : f32 to vector<32x32xf32>
    %110 = arith.select %3, %108, %109 : vector<32x32xi1>, vector<32x32xf32>
    %111 = arith.addf %51, %110 : vector<32x32xf32>
    %cst_52 = arith.constant dense<0xFF800000> : vector<32xf32>
    %112 = vector.multi_reduction <maximumf>, %111, %cst_52 [1] : vector<32x32xf32> to vector<32xf32>
    %113 = vector.shape_cast %112 : vector<32xf32> to vector<32x1xf32>
    %114 = vector.broadcast %113 : vector<32x1xf32> to vector<32x32xf32>
    %115 = arith.subf %111, %114 : vector<32x32xf32>
    %116 = math.exp %115 : vector<32x32xf32>
    %cst_53 = arith.constant dense<0.000000e+00> : vector<32xf32>
    %117 = vector.multi_reduction <add>, %116, %cst_53 [1] : vector<32x32xf32> to vector<32xf32>
    %118 = vector.shape_cast %117 : vector<32xf32> to vector<32x1xf32>
    %119 = vector.broadcast %118 : vector<32x1xf32> to vector<32x32xf32>
    %120 = arith.divf %116, %119 : vector<32x32xf32>
    %121 = arith.truncf %105 : vector<32x128xf32> to vector<32x128xbf16>
    %122 = arith.truncf %106 : vector<32x128xf32> to vector<32x128xbf16>
    %cst_54 = arith.constant dense<0.000000e+00> : vector<32x32xf32>
    %123 = tpu.matmul %121, %122, %cst_54 {dimension_numbers = #tpu.dot_dimension_numbers<[1], [1], [0], [0], [0, 0, 1, 0], [], []>} : vector<32x128xbf16>, vector<32x128xbf16>, vector<32x32xf32> -> vector<32x32xf32>
    %cst_55 = arith.constant 0.176776692 : f32
    %124 = vector.broadcast %cst_55 : f32 to vector<32x32xf32>
    %125 = arith.mulf %123, %124 : vector<32x32xf32>
    %cst_56 = arith.constant 0.000000e+00 : f32
    %126 = vector.broadcast %cst_56 : f32 to vector<32x32xf32>
    %127 = arith.cmpf ogt, %75, %126 : vector<32x32xf32>
    %cst_57 = arith.constant -1.000000e+09 : f32
    %128 = vector.broadcast %cst_57 : f32 to vector<32x32xf32>
    %129 = arith.select %127, %128, %125 : vector<32x32xi1>, vector<32x32xf32>
    %cst_58 = arith.constant dense<0xFF800000> : vector<32xf32>
    %130 = vector.multi_reduction <maximumf>, %129, %cst_58 [1] : vector<32x32xf32> to vector<32xf32>
    %131 = vector.shape_cast %130 : vector<32xf32> to vector<32x1xf32>
    %132 = vector.broadcast %131 : vector<32x1xf32> to vector<32x32xf32>
    %133 = arith.subf %129, %132 : vector<32x32xf32>
    %134 = math.exp %133 : vector<32x32xf32>
    %cst_59 = arith.constant dense<0.000000e+00> : vector<32xf32>
    %135 = vector.multi_reduction <add>, %134, %cst_59 [1] : vector<32x32xf32> to vector<32xf32>
    %136 = vector.shape_cast %135 : vector<32xf32> to vector<32x1xf32>
    %137 = tpu.reciprocal %136 {approx = true} : vector<32x1xf32> -> vector<32x1xf32>
    %138 = vector.broadcast %137 : vector<32x1xf32> to vector<32x32xf32>
    %139 = arith.mulf %134, %138 : vector<32x32xf32>
    %140 = arith.truncf %139 : vector<32x32xf32> to vector<32x32xbf16>
    %cst_60 = arith.constant dense<0.000000e+00> : vector<32x128xf32>
    %141 = tpu.matmul %140, %121, %cst_60 {dimension_numbers = #tpu.dot_dimension_numbers<[1], [0], [0], [1], [0, 0, 1, 1], [], []>} : vector<32x32xbf16>, vector<32x128xbf16>, vector<32x128xf32> -> vector<32x128xf32>
    %142 = arith.addf %72, %141 : vector<32x128xf32>
    %cst_61 = arith.constant 0.000000e+00 : f32
    %143 = vector.broadcast %cst_61 : f32 to vector<32x128xf32>
    %144 = arith.maximumf %142, %143 : vector<32x128xf32>
    %145 = math.sqrt %144 : vector<32x128xf32>
    %cst_62 = arith.constant 0.000000e+00 : f32
    %146 = vector.broadcast %cst_62 : f32 to vector<32x128xf32>
    %147 = arith.subf %146, %142 : vector<32x128xf32>
    %cst_63 = arith.constant 0.000000e+00 : f32
    %148 = vector.broadcast %cst_63 : f32 to vector<32x128xf32>
    %149 = arith.maximumf %147, %148 : vector<32x128xf32>
    %150 = math.sqrt %149 : vector<32x128xf32>
    %151 = arith.subf %145, %150 : vector<32x128xf32>
    %152 = arith.mulf %151, %151 : vector<32x128xf32>
    %cst_64 = arith.constant dense<0.000000e+00> : vector<32xf32>
    %153 = vector.multi_reduction <add>, %152, %cst_64 [1] : vector<32x128xf32> to vector<32xf32>
    %154 = vector.shape_cast %153 : vector<32xf32> to vector<32x1xf32>
    %cst_65 = arith.constant 1.000000e-24 : f32
    %155 = vector.broadcast %cst_65 : f32 to vector<32x1xf32>
    %156 = arith.maximumf %154, %155 : vector<32x1xf32>
    %157 = math.rsqrt %156 : vector<32x1xf32>
    %158 = vector.broadcast %157 : vector<32x1xf32> to vector<32x128xf32>
    %159 = arith.mulf %151, %158 : vector<32x128xf32>
    %160 = arith.addf %159, %86 : vector<32x128xf32>
    %161 = arith.truncf %86 : vector<32x128xf32> to vector<32x128xbf16>
    %c0_66 = arith.constant 0 : index
    %c0_67 = arith.constant 0 : index
    %162 = vector.load %arg5[%c0_66, %c0_67] : memref<128x256xbf16, #tpu.memory_space<vmem>>, vector<128x256xbf16>
    %cst_68 = arith.constant dense<0.000000e+00> : vector<32x256xf32>
    %163 = tpu.matmul %161, %162, %cst_68 {dimension_numbers = #tpu.dot_dimension_numbers<[1], [0], [0], [1], [0, 0, 1, 1], [], []>} : vector<32x128xbf16>, vector<128x256xbf16>, vector<32x256xf32> -> vector<32x256xf32>
    %164 = vector.extract_strided_slice %163 {offsets = [0, 0], sizes = [32, 128], strides = [1, 1]} : vector<32x256xf32> to vector<32x128xf32>
    %165 = arith.truncf %164 : vector<32x128xf32> to vector<32x128xbf16>
    %cst_69 = arith.constant dense<0.000000e+00> : vector<32x128xf32>
    %166 = tpu.matmul %1, %165, %cst_69 {dimension_numbers = #tpu.dot_dimension_numbers<[1], [0], [0], [1], [0, 0, 1, 1], [], []>} : vector<32x32xbf16>, vector<32x128xbf16>, vector<32x128xf32> -> vector<32x128xf32>
    %167 = vector.extract_strided_slice %163 {offsets = [0, 128], sizes = [32, 128], strides = [1, 1]} : vector<32x256xf32> to vector<32x128xf32>
    %168 = arith.addf %166, %167 : vector<32x128xf32>
    %c0_70 = arith.constant 0 : index
    %c0_71 = arith.constant 0 : index
    %169 = vector.load %arg6[%c0_70, %c0_71] : memref<1x128xf32, #tpu.memory_space<vmem>>, vector<1x128xf32>
    %170 = vector.broadcast %169 : vector<1x128xf32> to vector<32x128xf32>
    %171 = arith.addf %168, %170 : vector<32x128xf32>
    %172 = arith.truncf %160 : vector<32x128xf32> to vector<32x128xbf16>
    %c0_72 = arith.constant 0 : index
    %c0_73 = arith.constant 0 : index
    %173 = vector.load %arg7[%c0_72, %c0_73] : memref<128x256xbf16, #tpu.memory_space<vmem>>, vector<128x256xbf16>
    %cst_74 = arith.constant dense<0.000000e+00> : vector<32x256xf32>
    %174 = tpu.matmul %172, %173, %cst_74 {dimension_numbers = #tpu.dot_dimension_numbers<[1], [0], [0], [1], [0, 0, 1, 1], [], []>} : vector<32x128xbf16>, vector<128x256xbf16>, vector<32x256xf32> -> vector<32x256xf32>
    %175 = vector.extract_strided_slice %174 {offsets = [0, 0], sizes = [32, 128], strides = [1, 1]} : vector<32x256xf32> to vector<32x128xf32>
    %176 = arith.truncf %175 : vector<32x128xf32> to vector<32x128xbf16>
    %cst_75 = arith.constant dense<0.000000e+00> : vector<32x128xf32>
    %177 = tpu.matmul %1, %176, %cst_75 {dimension_numbers = #tpu.dot_dimension_numbers<[1], [0], [0], [1], [0, 0, 1, 1], [], []>} : vector<32x32xbf16>, vector<32x128xbf16>, vector<32x128xf32> -> vector<32x128xf32>
    %178 = vector.extract_strided_slice %174 {offsets = [0, 128], sizes = [32, 128], strides = [1, 1]} : vector<32x256xf32> to vector<32x128xf32>
    %179 = arith.addf %177, %178 : vector<32x128xf32>
    %c0_76 = arith.constant 0 : index
    %c0_77 = arith.constant 0 : index
    %180 = vector.load %arg8[%c0_76, %c0_77] : memref<1x128xf32, #tpu.memory_space<vmem>>, vector<1x128xf32>
    %181 = vector.broadcast %180 : vector<1x128xf32> to vector<32x128xf32>
    %182 = arith.addf %179, %181 : vector<32x128xf32>
    %183 = tpu.iota {dimensions = array<i32: 1>} : vector<32x128xi32>
    %c8_i32 = arith.constant 8 : i32
    %184 = vector.broadcast %c8_i32 : i32 to vector<32x128xi32>
    %185 = arith.cmpi slt, %183, %184 : vector<32x128xi32>
    %cst_78 = arith.constant -1.000000e+30 : f32
    %186 = vector.broadcast %cst_78 : f32 to vector<32x128xf32>
    %187 = arith.select %185, %182, %186 : vector<32x128xi1>, vector<32x128xf32>
    %cst_79 = arith.constant dense<0xFF800000> : vector<32xf32>
    %188 = vector.multi_reduction <maximumf>, %187, %cst_79 [1] : vector<32x128xf32> to vector<32xf32>
    %189 = vector.shape_cast %188 : vector<32xf32> to vector<32x1xf32>
    %190 = vector.broadcast %189 : vector<32x1xf32> to vector<32x128xf32>
    %191 = arith.subf %187, %190 : vector<32x128xf32>
    %192 = math.exp %191 : vector<32x128xf32>
    %cst_80 = arith.constant dense<0.000000e+00> : vector<32xf32>
    %193 = vector.multi_reduction <add>, %192, %cst_80 [1] : vector<32x128xf32> to vector<32xf32>
    %194 = vector.shape_cast %193 : vector<32xf32> to vector<32x1xf32>
    %195 = math.log %194 : vector<32x1xf32>
    %196 = arith.addf %189, %195 : vector<32x1xf32>
    %197 = vector.broadcast %196 : vector<32x1xf32> to vector<32x128xf32>
    %198 = arith.subf %182, %197 : vector<32x128xf32>
    %cst_81 = arith.constant 2.000000e+00 : f32
    %199 = vector.broadcast %cst_81 : f32 to vector<32x32xf32>
    %200 = arith.divf %120, %199 : vector<32x32xf32>
    %201 = math.floor %200 : vector<32x32xf32>
    %c0_82 = arith.constant 0 : index
    %c0_83 = arith.constant 0 : index
    %202 = vector.load %arg17[%c0_82, %c0_83] : memref<32x32xf32, #tpu.memory_space<vmem>>, vector<32x32xf32>
    tpu.vector_store %arg17[%c0_82, %c0_83], %201 {strides = array<i32>} : memref<32x32xf32, #tpu.memory_space<vmem>>, vector<32x32xf32>,
    %c0_84 = arith.constant 0 : index
    %c0_85 = arith.constant 0 : index
    %203 = vector.load %arg18[%c0_84, %c0_85] : memref<32x384xf32, #tpu.memory_space<vmem>>, vector<32x128xf32>
    tpu.vector_store %arg18[%c0_84, %c0_85], %97 {strides = array<i32>} : memref<32x384xf32, #tpu.memory_space<vmem>>, vector<32x128xf32>,
    %c0_86 = arith.constant 0 : index
    %c128 = arith.constant 128 : index
    %204 = vector.load %arg18[%c0_86, %c128] : memref<32x384xf32, #tpu.memory_space<vmem>>, vector<32x128xf32>
    tpu.vector_store %arg18[%c0_86, %c128], %171 {strides = array<i32>} : memref<32x384xf32, #tpu.memory_space<vmem>>, vector<32x128xf32>,
    %c0_87 = arith.constant 0 : index
    %c256 = arith.constant 256 : index
    %205 = vector.load %arg18[%c0_87, %c256] : memref<32x384xf32, #tpu.memory_space<vmem>>, vector<32x128xf32>
    tpu.vector_store %arg18[%c0_87, %c256], %198 {strides = array<i32>} : memref<32x384xf32, #tpu.memory_space<vmem>>, vector<32x128xf32>,
    return
  }
}

</mosaic_0001>

<llo_original>
// kernel: forward.1
$region0: #{forward.1}
  #allocation0 [shape = 'u32[]', space=smem, size = 0x4, offset = 0x4, fixed_abs, tag = 'smem constant byte address 0x4 - core index']
  #allocation1 [shape = 'u32[72,128]{1,0:T(1,128)}', space=vmem, size = 0x9000, scoped, tag = 'internal scratch']
  %s0 = inlined_call_operand.vmem [shape: f32[32,128], index: 0, kind: input, shape index: {}]
  %s1 = inlined_call_operand.hbm [shape: f32[32,32], index: 1, kind: input, shape index: {}]
  %s2 = inlined_call_operand.vmem [shape: bf16[128,256], index: 2, kind: input, shape index: {}]
  %s3 = inlined_call_operand.hbm [shape: f32[1,128], index: 3, kind: input, shape index: {}]
  %s4 = inlined_call_operand.hbm [shape: f32[1,128], index: 4, kind: input, shape index: {}]
  %s5 = inlined_call_operand.hbm [shape: bf16[128,256], index: 5, kind: input, shape index: {}]
  %s6 = inlined_call_operand.hbm [shape: f32[1,128], index: 6, kind: input, shape index: {}]
  %s7 = inlined_call_operand.hbm [shape: bf16[128,256], index: 7, kind: input, shape index: {}]
  %s8 = inlined_call_operand.hbm [shape: f32[1,128], index: 8, kind: input, shape index: {}]
  %s9 = inlined_call_operand.hbm [shape: bf16[128,512], index: 9, kind: input, shape index: {}]
  %s10 = inlined_call_operand.vmem [shape: bf16[128,128], index: 10, kind: input, shape index: {}]
  %s11 = inlined_call_operand.hbm [shape: f32[1,256], index: 11, kind: input, shape index: {}]
  %s12 = inlined_call_operand.hbm [shape: bf16[128,512], index: 12, kind: input, shape index: {}]
  %s13 = inlined_call_operand.hbm [shape: bf16[128,128], index: 13, kind: input, shape index: {}]
  %s14 = inlined_call_operand.hbm [shape: f32[1,256], index: 14, kind: input, shape index: {}]
  %s15 = inlined_call_operand.hbm [shape: bf16[128,256], index: 15, kind: input, shape index: {}]
  %s16 = inlined_call_operand.hbm [shape: f32[1,128], index: 16, kind: input, shape index: {}]
  %s17 = inlined_call_operand.hbm [shape: f32[32,32], index: 17, kind: output, shape index: {0}]
  %s18 = inlined_call_operand.vmem [shape: f32[32,384], index: 18, kind: output, shape index: {1}]
  %19 = xla_tuple %s17, %s18
  %s20 = sld [smem:[#allocation0]]
  $region142: #{forward.1} parent=0
    _
  %s22 = ssub.s32 1, %s20
  %s23 = scalar_select 0, %s22, %s20
  $region1: #{forward.1} parent=0
    #allocation2 [shape = 'u8[16384]{0}', space=vmem, size = 0x4000, scoped, tag = 'input window, operand 1, single buffered']
    #allocation3 [shape = 's32[1]{0}', space=sflag, size = 0x4, scoped, tag = 'scoped memory for forward.1']
    #allocation4 [shape = 's32[1]{0}', space=sflag, size = 0x4, scoped, tag = 'scoped memory for forward.1']
    #allocation5 [shape = 'u8[512]{0}', space=vmem, size = 0x400, scoped, tag = 'input window, operand 3, single buffered']
    #allocation6 [shape = 's32[1]{0}', space=sflag, size = 0x4, scoped, tag = 'scoped memory for forward.1']
    #allocation7 [shape = 'u8[512]{0}', space=vmem, size = 0x400, scoped, tag = 'input window, operand 4, single buffered']
    #allocation8 [shape = 'u8[65536]{0}', space=vmem, size = 0x10000, scoped, tag = 'input window, operand 5, single buffered']
    #allocation9 [shape = 's32[1]{0}', space=sflag, size = 0x4, scoped, tag = 'scoped memory for forward.1']
    #allocation10 [shape = 'u8[512]{0}', space=vmem, size = 0x400, scoped, tag = 'input window, operand 6, single buffered']
    #allocation11 [shape = 'u8[65536]{0}', space=vmem, size = 0x10000, scoped, tag = 'input window, operand 7, single buffered']
    #allocation12 [shape = 's32[1]{0}', space=sflag, size = 0x4, scoped, tag = 'scoped memory for forward.1']
    #allocation13 [shape = 'u8[512]{0}', space=vmem, size = 0x400, scoped, tag = 'input window, operand 8, single buffered']
    #allocation14 [shape = 'u8[131072]{0}', space=vmem, size = 0x20000, scoped, tag = 'input window, operand 9, single buffered']
    #allocation15 [shape = 's32[1]{0}', space=sflag, size = 0x4, scoped, tag = 'scoped memory for forward.1']
    #allocation16 [shape = 'u8[1024]{0}', space=vmem, size = 0x400, scoped, tag = 'input window, operand 11, single buffered']
    #allocation17 [shape = 'u8[131072]{0}', space=vmem, size = 0x20000, scoped, tag = 'input window, operand 12, single buffered']
    #allocation18 [shape = 's32[1]{0}', space=sflag, size = 0x4, scoped, tag = 'scoped memory for forward.1']
    #allocation19 [shape = 'u8[32768]{0}', space=vmem, size = 0x8000, scoped, tag = 'input window, operand 13, single buffered']
    #allocation20 [shape = 'u8[1024]{0}', space=vmem, size = 0x400, scoped, tag = 'input window, operand 14, single buffered']
    #allocation21 [shape = 's32[1]{0}', space=sflag, size = 0x4, scoped, tag = 'scoped memory for forward.1']
    #allocation22 [shape = 'u8[65536]{0}', space=vmem, size = 0x10000, scoped, tag = 'input window, operand 15, single buffered']
    #allocation23 [shape = 'u8[512]{0}', space=vmem, size = 0x400, scoped, tag = 'input window, operand 16, single buffered']
    #allocation24 [shape = 's32[1]{0}', space=sflag, size = 0x4, scoped, tag = 'scoped memory for forward.1']
    #allocation25 [shape = 'u8[16384]{0}', space=vmem, size = 0x4000, scoped, tag = 'output window, operand 0, single buffered']
    %24 = vsyncpa [#allocation3], 0
    %25 = vsyncpa [#allocation6], 0
    %26 = vsyncpa [#allocation9], 0
    %27 = vsyncpa [#allocation12], 0
    %28 = vsyncpa [#allocation15], 0
    %29 = vsyncpa [#allocation18], 0
    %30 = vsyncpa [#allocation21], 0
    %31 = vsyncpa [#allocation24], 0
    %32 = vsyncpa [#allocation4], 0
    // Predicated region
    $region2: #{forward.1} parent=1 // pred_check
      _
    $region3: #{forward.1} parent=1 // pred_check_branch
      %34 = sbr.rel (0) target = $region5
    $region4: #{forward.1} parent=1 // pred_region
      _
    $region5: #{forward.1} parent=1 // pred_fallthru
      _
    // Predicated region
    $region6: #{forward.1} parent=1 // pred_check
      _
    $region7: #{forward.1} parent=1 // pred_check_branch
      %36 = sbr.rel (0) target = $region9
    $region8: #{forward.1} parent=1 // pred_region
      %38 = vsyncadd [#allocation3], 0
      %s39 = sshll.u32 %s1, 4
      %s40 = int_to_ptr.hbm [resolvable:$true] %s39
      %s41 = sshll.u32 [#allocation2], 4
      %s42 = int_to_ptr.vmem [resolvable:$true] %s41
      %47 = dma.hbm_to_vmem [thread:$0]  %s40, 512, %s42, [#allocation3], 128, 128, 8
    $region9: #{forward.1} parent=1 // pred_fallthru
      _
    // Predicated region
    $region10: #{forward.1} parent=1 // pred_check
      _
    $region11: #{forward.1} parent=1 // pred_check_branch
      %49 = sbr.rel (0) target = $region13
    $region12: #{forward.1} parent=1 // pred_region
      _
    $region13: #{forward.1} parent=1 // pred_fallthru
      _
    // Predicated region
    $region14: #{forward.1} parent=1 // pred_check
      _
    $region15: #{forward.1} parent=1 // pred_check_branch
      %51 = sbr.rel (0) target = $region17
    $region16: #{forward.1} parent=1 // pred_region
      %53 = vsyncadd [#allocation6], 0
      %s55 = sshll.u32 %s3, 4
      %s56 = int_to_ptr.hbm [resolvable:$true] %s55
      %s57 = sshll.u32 [#allocation5], 4
      %s58 = int_to_ptr.vmem [resolvable:$true] %s57
      %60 = dma.hbm_to_vmem [thread:$0]  %s56, 16, %s58, [#allocation6]
    $region17: #{forward.1} parent=1 // pred_fallthru
      _
    // Predicated region
    $region18: #{forward.1} parent=1 // pred_check
      _
    $region19: #{forward.1} parent=1 // pred_check_branch
      %62 = sbr.rel (0) target = $region21
    $region20: #{forward.1} parent=1 // pred_region
      %64 = vsyncadd [#allocation6], 0
      %s66 = sshll.u32 %s4, 4
      %s67 = int_to_ptr.hbm [resolvable:$true] %s66
      %s68 = sshll.u32 [#allocation7], 4
      %s69 = int_to_ptr.vmem [resolvable:$true] %s68
      %71 = dma.hbm_to_vmem [thread:$0]  %s67, 16, %s69, [#allocation6]
    $region21: #{forward.1} parent=1 // pred_fallthru
      _
    // Predicated region
    $region22: #{forward.1} parent=1 // pred_check
      _
    $region23: #{forward.1} parent=1 // pred_check_branch
      %73 = sbr.rel (0) target = $region25
    $region24: #{forward.1} parent=1 // pred_region
      %75 = vsyncadd [#allocation9], 0
      %s76 = sshll.u32 %s5, 4
      %s77 = int_to_ptr.hbm [resolvable:$true] %s76
      %s78 = sshll.u32 [#allocation8], 4
      %s79 = int_to_ptr.vmem [resolvable:$true] %s78
      %84 = dma.hbm_to_vmem [thread:$0]  %s77, 2048, %s79, [#allocation9], 128, 128, 8
    $region25: #{forward.1} parent=1 // pred_fallthru
      _
    // Predicated region
    $region26: #{forward.1} parent=1 // pred_check
      _
    $region27: #{forward.1} parent=1 // pred_check_branch
      %86 = sbr.rel (0) target = $region29
    $region28: #{forward.1} parent=1 // pred_region
      %88 = vsyncadd [#allocation9], 0
      %s90 = sshll.u32 %s6, 4
      %s91 = int_to_ptr.hbm [resolvable:$true] %s90
      %s92 = sshll.u32 [#allocation10], 4
      %s93 = int_to_ptr.vmem [resolvable:$true] %s92
      %95 = dma.hbm_to_vmem [thread:$0]  %s91, 16, %s93, [#allocation9]
    $region29: #{forward.1} parent=1 // pred_fallthru
      _
    // Predicated region
    $region30: #{forward.1} parent=1 // pred_check
      _
    $region31: #{forward.1} parent=1 // pred_check_branch
      %97 = sbr.rel (0) target = $region33
    $region32: #{forward.1} parent=1 // pred_region
      %99 = vsyncadd [#allocation12], 0
      %s100 = sshll.u32 %s7, 4
      %s101 = int_to_ptr.hbm [resolvable:$true] %s100
      %s102 = sshll.u32 [#allocation11], 4
      %s103 = int_to_ptr.vmem [resolvable:$true] %s102
      %108 = dma.hbm_to_vmem [thread:$0]  %s101, 2048, %s103, [#allocation12], 128, 128, 8
    $region33: #{forward.1} parent=1 // pred_fallthru
      _
    // Predicated region
    $region34: #{forward.1} parent=1 // pred_check
      _
    $region35: #{forward.1} parent=1 // pred_check_branch
      %110 = sbr.rel (0) target = $region37
    $region36: #{forward.1} parent=1 // pred_region
      %112 = vsyncadd [#allocation12], 0
      %s114 = sshll.u32 %s8, 4
      %s115 = int_to_ptr.hbm [resolvable:$true] %s114
      %s116 = sshll.u32 [#allocation13], 4
      %s117 = int_to_ptr.vmem [resolvable:$true] %s116
      %119 = dma.hbm_to_vmem [thread:$0]  %s115, 16, %s117, [#allocation12]
    $region37: #{forward.1} parent=1 // pred_fallthru
      _
    // Predicated region
    $region38: #{forward.1} parent=1 // pred_check
      _
    $region39: #{forward.1} parent=1 // pred_check_branch
      %121 = sbr.rel (0) target = $region41
    $region40: #{forward.1} parent=1 // pred_region
      %123 = vsyncadd [#allocation15], 0
      %s124 = sshll.u32 %s9, 4
      %s125 = int_to_ptr.hbm [resolvable:$true] %s124
      %s126 = sshll.u32 [#allocation14], 4
      %s127 = int_to_ptr.vmem [resolvable:$true] %s126
      %132 = dma.hbm_to_vmem [thread:$0]  %s125, 4096, %s127, [#allocation15], 256, 256, 16
    $region41: #{forward.1} parent=1 // pred_fallthru
      _
    // Predicated region
    $region42: #{forward.1} parent=1 // pred_check
      _
    $region43: #{forward.1} parent=1 // pred_check_branch
      %134 = sbr.rel (0) target = $region45
    $region44: #{forward.1} parent=1 // pred_region
      _
    $region45: #{forward.1} parent=1 // pred_fallthru
      _
    // Predicated region
    $region46: #{forward.1} parent=1 // pred_check
      _
    $region47: #{forward.1} parent=1 // pred_check_branch
      %136 = sbr.rel (0) target = $region49
    $region48: #{forward.1} parent=1 // pred_region
      %138 = vsyncadd [#allocation15], 0
      %s140 = sshll.u32 %s11, 4
      %s141 = int_to_ptr.hbm [resolvable:$true] %s140
      %s142 = sshll.u32 [#allocation16], 4
      %s143 = int_to_ptr.vmem [resolvable:$true] %s142
      %145 = dma.hbm_to_vmem [thread:$0]  %s141, 32, %s143, [#allocation15]
    $region49: #{forward.1} parent=1 // pred_fallthru
      _
    // Predicated region
    $region50: #{forward.1} parent=1 // pred_check
      _
    $region51: #{forward.1} parent=1 // pred_check_branch
      %147 = sbr.rel (0) target = $region53
    $region52: #{forward.1} parent=1 // pred_region
      %149 = vsyncadd [#allocation18], 0
      %s150 = sshll.u32 %s12, 4
      %s151 = int_to_ptr.hbm [resolvable:$true] %s150
      %s152 = sshll.u32 [#allocation17], 4
      %s153 = int_to_ptr.vmem [resolvable:$true] %s152
      %158 = dma.hbm_to_vmem [thread:$0]  %s151, 4096, %s153, [#allocation18], 256, 256, 16
    $region53: #{forward.1} parent=1 // pred_fallthru
      _
    // Predicated region
    $region54: #{forward.1} parent=1 // pred_check
      _
    $region55: #{forward.1} parent=1 // pred_check_branch
      %160 = sbr.rel (0) target = $region57
    $region56: #{forward.1} parent=1 // pred_region
      %162 = vsyncadd [#allocation18], 0
      %s163 = sshll.u32 %s13, 4
      %s164 = int_to_ptr.hbm [resolvable:$true] %s163
      %s165 = sshll.u32 [#allocation19], 4
      %s166 = int_to_ptr.vmem [resolvable:$true] %s165
      %171 = dma.hbm_to_vmem [thread:$0]  %s164, 1024, %s166, [#allocation18], 64, 64, 4
    $region57: #{forward.1} parent=1 // pred_fallthru
      _
    // Predicated region
    $region58: #{forward.1} parent=1 // pred_check
      _
    $region59: #{forward.1} parent=1 // pred_check_branch
      %173 = sbr.rel (0) target = $region61
    $region60: #{forward.1} parent=1 // pred_region
      %175 = vsyncadd [#allocation21], 0
      %s177 = sshll.u32 %s14, 4
      %s178 = int_to_ptr.hbm [resolvable:$true] %s177
      %s179 = sshll.u32 [#allocation20], 4
      %s180 = int_to_ptr.vmem [resolvable:$true] %s179
      %182 = dma.hbm_to_vmem [thread:$0]  %s178, 32, %s180, [#allocation21]
    $region61: #{forward.1} parent=1 // pred_fallthru
      _
    // Predicated region
    $region62: #{forward.1} parent=1 // pred_check
      _
    $region63: #{forward.1} parent=1 // pred_check_branch
      %184 = sbr.rel (0) target = $region65
    $region64: #{forward.1} parent=1 // pred_region
      %186 = vsyncadd [#allocation21], 0
      %s187 = sshll.u32 %s15, 4
      %s188 = int_to_ptr.hbm [resolvable:$true] %s187
      %s189 = sshll.u32 [#allocation22], 4
      %s190 = int_to_ptr.vmem [resolvable:$true] %s189
      %195 = dma.hbm_to_vmem [thread:$0]  %s188, 2048, %s190, [#allocation21], 128, 128, 8
    $region65: #{forward.1} parent=1 // pred_fallthru
      _
    // Predicated region
    $region66: #{forward.1} parent=1 // pred_check
      _
    $region67: #{forward.1} parent=1 // pred_check_branch
      %197 = sbr.rel (0) target = $region69
    $region68: #{forward.1} parent=1 // pred_region
      %199 = vsyncadd [#allocation24], 0
      %s201 = sshll.u32 %s16, 4
      %s202 = int_to_ptr.hbm [resolvable:$true] %s201
      %s203 = sshll.u32 [#allocation23], 4
      %s204 = int_to_ptr.vmem [resolvable:$true] %s203
      %206 = dma.hbm_to_vmem [thread:$0]  %s202, 16, %s204, [#allocation24]
    $region69: #{forward.1} parent=1 // pred_fallthru
      _
    // Predicated region
    $region70: #{forward.1} parent=1 // pred_check
      _
    $region71: #{forward.1} parent=1 // pred_check_branch
      %208 = sbr.rel (0) target = $region73
    $region72: #{forward.1} parent=1 // pred_region
      %210 = dma.done [#allocation3], 512
    $region73: #{forward.1} parent=1 // pred_fallthru
      _
    // Predicated region
    $region74: #{forward.1} parent=1 // pred_check
      _
    $region75: #{forward.1} parent=1 // pred_check_branch
      %212 = sbr.rel (0) target = $region77
    $region76: #{forward.1} parent=1 // pred_region
      %214 = dma.done [#allocation6], 16
    $region77: #{forward.1} parent=1 // pred_fallthru
      _
    // Predicated region
    $region78: #{forward.1} parent=1 // pred_check
      _
    $region79: #{forward.1} parent=1 // pred_check_branch
      %216 = sbr.rel (0) target = $region81
    $region80: #{forward.1} parent=1 // pred_region
      %218 = dma.done [#allocation6], 16
    $region81: #{forward.1} parent=1 // pred_fallthru
      _
    // Predicated region
    $region82: #{forward.1} parent=1 // pred_check
      _
    $region83: #{forward.1} parent=1 // pred_check_branch
      %220 = sbr.rel (0) target = $region85
    $region84: #{forward.1} parent=1 // pred_region
      %222 = dma.done [#allocation9], 2048
    $region85: #{forward.1} parent=1 // pred_fallthru
      _
    // Predicated region
    $region86: #{forward.1} parent=1 // pred_check
      _
    $region87: #{forward.1} parent=1 // pred_check_branch
      %224 = sbr.rel (0) target = $region89
    $region88: #{forward.1} parent=1 // pred_region
      %226 = dma.done [#allocation9], 16
    $region89: #{forward.1} parent=1 // pred_fallthru
      _
    // Predicated region
    $region90: #{forward.1} parent=1 // pred_check
      _
    $region91: #{forward.1} parent=1 // pred_check_branch
      %228 = sbr.rel (0) target = $region93
    $region92: #{forward.1} parent=1 // pred_region
      %230 = dma.done [#allocation12], 2048
    $region93: #{forward.1} parent=1 // pred_fallthru
      _
    // Predicated region
    $region94: #{forward.1} parent=1 // pred_check
      _
    $region95: #{forward.1} parent=1 // pred_check_branch
      %232 = sbr.rel (0) target = $region97
    $region96: #{forward.1} parent=1 // pred_region
      %234 = dma.done [#allocation12], 16
    $region97: #{forward.1} parent=1 // pred_fallthru
      _
    // Predicated region
    $region98: #{forward.1} parent=1 // pred_check
      _
    $region99: #{forward.1} parent=1 // pred_check_branch
      %236 = sbr.rel (0) target = $region101
    $region100: #{forward.1} parent=1 // pred_region
      %238 = dma.done [#allocation15], 4096
    $region101: #{forward.1} parent=1 // pred_fallthru
      _
    // Predicated region
    $region102: #{forward.1} parent=1 // pred_check
      _
    $region103: #{forward.1} parent=1 // pred_check_branch
      %240 = sbr.rel (0) target = $region105
    $region104: #{forward.1} parent=1 // pred_region
      %242 = dma.done [#allocation15], 32
    $region105: #{forward.1} parent=1 // pred_fallthru
      _
    // Predicated region
    $region106: #{forward.1} parent=1 // pred_check
      _
    $region107: #{forward.1} parent=1 // pred_check_branch
      %244 = sbr.rel (0) target = $region109
    $region108: #{forward.1} parent=1 // pred_region
      %246 = dma.done [#allocation18], 4096
    $region109: #{forward.1} parent=1 // pred_fallthru
      _
    // Predicated region
    $region110: #{forward.1} parent=1 // pred_check
      _
    $region111: #{forward.1} parent=1 // pred_check_branch
      %248 = sbr.rel (0) target = $region113
    $region112: #{forward.1} parent=1 // pred_region
      %250 = dma.done [#allocation18], 1024
    $region113: #{forward.1} parent=1 // pred_fallthru
      _
    // Predicated region
    $region114: #{forward.1} parent=1 // pred_check
      _
    $region115: #{forward.1} parent=1 // pred_check_branch
      %252 = sbr.rel (0) target = $region117
    $region116: #{forward.1} parent=1 // pred_region
      %254 = dma.done [#allocation21], 32
    $region117: #{forward.1} parent=1 // pred_fallthru
      _
    // Predicated region
    $region118: #{forward.1} parent=1 // pred_check
      _
    $region119: #{forward.1} parent=1 // pred_check_branch
      %256 = sbr.rel (0) target = $region121
    $region120: #{forward.1} parent=1 // pred_region
      %258 = dma.done [#allocation21], 2048
    $region121: #{forward.1} parent=1 // pred_fallthru
      _
    // Predicated region
    $region122: #{forward.1} parent=1 // pred_check
      _
    $region123: #{forward.1} parent=1 // pred_check_branch
      %260 = sbr.rel (0) target = $region125
    $region124: #{forward.1} parent=1 // pred_region
      %262 = dma.done [#allocation24], 16
    $region125: #{forward.1} parent=1 // pred_fallthru
      _
    %v264 = vld [vmem:[#allocation2] sm:$0xff]
    %v265 = vld [vmem:[#allocation2 + $0x8] sm:$0xff]
    %v266 = vld [vmem:[#allocation2 + $0x10] sm:$0xff]
    %v267 = vld [vmem:[#allocation2 + $0x18] sm:$0xff]
    %v268 = vpack.c.bf16 %v265, %v264
    %v269 = vpack.c.bf16 %v267, %v266
    %vm270 = vcmp.gt.f32.partialorder %v264, 0.0
    %vm271 = vcmp.gt.f32.partialorder %v265, 0.0
    %vm272 = vcmp.gt.f32.partialorder %v266, 0.0
    %vm273 = vcmp.gt.f32.partialorder %v267, 0.0
    %v274 = vld [vmem:[%s0] sm:$0xff]
    %v275 = vld [vmem:[%s0 + $0x8] sm:$0xff]
    %v276 = vld [vmem:[%s0 + $0x10] sm:$0xff]
    %v277 = vld [vmem:[%s0 + $0x18] sm:$0xff]
    %v278 = vpack.c.bf16 %v275, %v274
    %v279 = vpack.c.bf16 %v277, %v276
    %v280 = vsel %vm270, 1.0, %v264
    %v281 = vsel %vm271, 1.0, %v265
    %v282 = vsel %vm272, 1.0, %v266
    %v283 = vsel %vm273, 1.0, %v267
    %v284 = vld [vmem:[%s2] sm:$0xff]
    %v285 = vld [vmem:[%s2 + $0x8] sm:$0xff]
    %v286 = vld [vmem:[%s2 + $0x10] sm:$0xff]
    %v287 = vld [vmem:[%s2 + $0x18] sm:$0xff]
    %v288 = vld [vmem:[%s2 + $0x20] sm:$0xff]
    %v289 = vld [vmem:[%s2 + $0x28] sm:$0xff]
    %v290 = vld [vmem:[%s2 + $0x30] sm:$0xff]
    %v291 = vld [vmem:[%s2 + $0x38] sm:$0xff]
    %v292 = vld [vmem:[%s2 + $0x40] sm:$0xff]
    %v293 = vld [vmem:[%s2 + $0x48] sm:$0xff]
    %v294 = vld [vmem:[%s2 + $0x50] sm:$0xff]
    %v295 = vld [vmem:[%s2 + $0x58] sm:$0xff]
    %v296 = vld [vmem:[%s2 + $0x60] sm:$0xff]
    %v297 = vld [vmem:[%s2 + $0x68] sm:$0xff]
    %v298 = vld [vmem:[%s2 + $0x70] sm:$0xff]
    %v299 = vld [vmem:[%s2 + $0x78] sm:$0xff]
    %v316 = vunpack.c.l.b16 %v284
    %v317 = vunpack.c.h.b16 %v284
    %v318 = vunpack.c.l.b16 %v285
    %v319 = vunpack.c.h.b16 %v285
    %v320 = vunpack.c.l.b16 %v286
    %v321 = vunpack.c.h.b16 %v286
    %v322 = vunpack.c.l.b16 %v287
    %v323 = vunpack.c.h.b16 %v287
    %v324 = vunpack.c.l.b16 %v288
    %v325 = vunpack.c.h.b16 %v288
    %v326 = vunpack.c.l.b16 %v289
    %v327 = vunpack.c.h.b16 %v289
    %v328 = vunpack.c.l.b16 %v290
    %v329 = vunpack.c.h.b16 %v290
    %v330 = vunpack.c.l.b16 %v291
    %v331 = vunpack.c.h.b16 %v291
    %v332 = vunpack.c.l.b16 %v292
    %v333 = vunpack.c.h.b16 %v292
    %v334 = vunpack.c.l.b16 %v293
    %v335 = vunpack.c.h.b16 %v293
    %v336 = vunpack.c.l.b16 %v294
    %v337 = vunpack.c.h.b16 %v294
    %v338 = vunpack.c.l.b16 %v295
    %v339 = vunpack.c.h.b16 %v295
    %v340 = vunpack.c.l.b16 %v296
    %v341 = vunpack.c.h.b16 %v296
    %v342 = vunpack.c.l.b16 %v297
    %v343 = vunpack.c.h.b16 %v297
    %v344 = vunpack.c.l.b16 %v298
    %v345 = vunpack.c.h.b16 %v298
    %v346 = vunpack.c.l.b16 %v299
    %v347 = vunpack.c.h.b16 %v299
    %v348 = vpack.c.b16 %v318, %v316
    %v349 = vpack.c.b16 %v319, %v317
    %v350 = vpack.c.b16 %v322, %v320
    %v351 = vpack.c.b16 %v323, %v321
    %v352 = vpack.c.b16 %v326, %v324
    %v353 = vpack.c.b16 %v327, %v325
    %v354 = vpack.c.b16 %v330, %v328
    %v355 = vpack.c.b16 %v331, %v329
    %v356 = vpack.c.b16 %v334, %v332
    %v357 = vpack.c.b16 %v335, %v333
    %v358 = vpack.c.b16 %v338, %v336
    %v359 = vpack.c.b16 %v339, %v337
    %v360 = vpack.c.b16 %v342, %v340
    %v361 = vpack.c.b16 %v343, %v341
    %v362 = vpack.c.b16 %v346, %v344
    %v363 = vpack.c.b16 %v347, %v345
    %380 = vmatpush.bf16.msra.mxu0 %v362
    %381 = vmatpush.bf16.msra.mxu0 %v360
    %382 = vmatpush.bf16.msra.mxu0 %v358
    %383 = vmatpush.bf16.msra.mxu0 %v356
    %384 = vmatpush.bf16.msra.mxu0 %v354
    %385 = vmatpush.bf16.msra.mxu0 %v352
    %386 = vmatpush.bf16.msra.mxu0 %v350
    %387 = vmatpush.bf16.msra.mxu0 %v348
    %388 = vmatmul.bf16.gmra.mxu0 %v278
    %v389 = vpop.f32.mrf.mxu0
    %v390 = vadd.f32 0.0, %v389
    %v391 = vpop.f32.mrf.mxu0
    %v392 = vadd.f32 0.0, %v391
    %393 = vmatmul.bf16.gmra.mxu0 %v279
    %v394 = vpop.f32.mrf.mxu0
    %v395 = vadd.f32 0.0, %v394
    %v396 = vpop.f32.mrf.mxu0
    %v397 = vadd.f32 0.0, %v396
    %398 = vdwg.mxu0
    %399 = vmatpush.bf16.msra.mxu0 %v363
    %400 = vmatpush.bf16.msra.mxu0 %v361
    %401 = vmatpush.bf16.msra.mxu0 %v359
    %402 = vmatpush.bf16.msra.mxu0 %v357
    %403 = vmatpush.bf16.msra.mxu0 %v355
    %404 = vmatpush.bf16.msra.mxu0 %v353
    %405 = vmatpush.bf16.msra.mxu0 %v351
    %406 = vmatpush.bf16.msra.mxu0 %v349
    %407 = vmatmul.bf16.gmra.mxu0 %v278
    %v408 = vpop.f32.mrf.mxu0
    %v409 = vadd.f32 0.0, %v408
    %v410 = vpop.f32.mrf.mxu0
    %v411 = vadd.f32 0.0, %v410
    %412 = vmatmul.bf16.gmra.mxu0 %v279
    %v413 = vpop.f32.mrf.mxu0
    %v414 = vadd.f32 0.0, %v413
    %v415 = vpop.f32.mrf.mxu0
    %v416 = vadd.f32 0.0, %v415
    %417 = vdwg.mxu0
    %v418 = vpack.c.bf16 %v392, %v390
    %v419 = vpack.c.bf16 %v397, %v395
    %vm420 = vcmask 261120
    %v422 = vsel %vm420, %v268, 0
    %v425 = vsel %vm420, %v269, 0
    %427 = vmatpush.bf16.msra.mxu0 0
    %428 = vmatpush.bf16.msra.mxu0 0
    %429 = vmatpush.bf16.msra.mxu0 0
    %430 = vmatpush.bf16.msra.mxu0 0
    %431 = vmatpush.bf16.msra.mxu0 0
    %432 = vmatpush.bf16.msra.mxu0 0
    %433 = vmatpush.bf16.msra.mxu0 %v419
    %434 = vmatpush.bf16.msra.mxu0 %v418
    %435 = vmatmul.bf16.gmra.mxu0 %v422
    %v436 = vpop.f32.mrf.mxu0
    %v437 = vadd.f32 %v409, %v436
    %v438 = vpop.f32.mrf.mxu0
    %v439 = vadd.f32 %v411, %v438
    %440 = vmatmul.bf16.gmra.mxu0 %v425
    %v441 = vpop.f32.mrf.mxu0
    %v442 = vadd.f32 %v414, %v441
    %v443 = vpop.f32.mrf.mxu0
    %v444 = vadd.f32 %v416, %v443
    %445 = vdwg.mxu0
    %v446 = vld [vmem:[#allocation5] sm:$0x1]
    %v448 = vperm.slane %v446, 0
    %v450 = vadd.f32 %v437, %v448
    %v451 = vadd.f32 %v439, %v448
    %v452 = vadd.f32 %v442, %v448
    %v453 = vadd.f32 %v444, %v448
    %v454 = vpack.c.bf16 %v451, %v450
    %v455 = vpack.c.bf16 %v453, %v452
    %v456 = vld [vmem:[#allocation14] sm:$0xff]
    %v457 = vld [vmem:[#allocation14 + $0x8] sm:$0xff]
    %v458 = vld [vmem:[#allocation14 + $0x10] sm:$0xff]
    %v459 = vld [vmem:[#allocation14 + $0x18] sm:$0xff]
    %v460 = vld [vmem:[#allocation14 + $0x20] sm:$0xff]
    %v461 = vld [vmem:[#allocation14 + $0x28] sm:$0xff]
    %v462 = vld [vmem:[#allocation14 + $0x30] sm:$0xff]
    %v463 = vld [vmem:[#allocation14 + $0x38] sm:$0xff]
    %v464 = vld [vmem:[#allocation14 + $0x40] sm:$0xff]
    %v465 = vld [vmem:[#allocation14 + $0x48] sm:$0xff]
    %v466 = vld [vmem:[#allocation14 + $0x50] sm:$0xff]
    %v467 = vld [vmem:[#allocation14 + $0x58] sm:$0xff]
    %v468 = vld [vmem:[#allocation14 + $0x60] sm:$0xff]
    %v469 = vld [vmem:[#allocation14 + $0x68] sm:$0xff]
    %v470 = vld [vmem:[#allocation14 + $0x70] sm:$0xff]
    %v471 = vld [vmem:[#allocation14 + $0x78] sm:$0xff]
    %v472 = vld [vmem:[#allocation14 + $0x80] sm:$0xff]
    %v473 = vld [vmem:[#allocation14 + $0x88] sm:$0xff]
    %v474 = vld [vmem:[#allocation14 + $0x90] sm:$0xff]
    %v475 = vld [vmem:[#allocation14 + $0x98] sm:$0xff]
    %v476 = vld [vmem:[#allocation14 + $0xa0] sm:$0xff]
    %v477 = vld [vmem:[#allocation14 + $0xa8] sm:$0xff]
    %v478 = vld [vmem:[#allocation14 + $0xb0] sm:$0xff]
    %v479 = vld [vmem:[#allocation14 + $0xb8] sm:$0xff]
    %v480 = vld [vmem:[#allocation14 + $0xc0] sm:$0xff]
    %v481 = vld [vmem:[#allocation14 + $0xc8] sm:$0xff]
    %v482 = vld [vmem:[#allocation14 + $0xd0] sm:$0xff]
    %v483 = vld [vmem:[#allocation14 + $0xd8] sm:$0xff]
    %v484 = vld [vmem:[#allocation14 + $0xe0] sm:$0xff]
    %v485 = vld [vmem:[#allocation14 + $0xe8] sm:$0xff]
    %v486 = vld [vmem:[#allocation14 + $0xf0] sm:$0xff]
    %v487 = vld [vmem:[#allocation14 + $0xf8] sm:$0xff]
    %v520 = vunpack.c.l.b16 %v456
    %v521 = vunpack.c.h.b16 %v456
    %v522 = vunpack.c.l.b16 %v457
    %v523 = vunpack.c.h.b16 %v457
    %v524 = vunpack.c.l.b16 %v458
    %v525 = vunpack.c.h.b16 %v458
    %v526 = vunpack.c.l.b16 %v459
    %v527 = vunpack.c.h.b16 %v459
    %v528 = vunpack.c.l.b16 %v460
    %v529 = vunpack.c.h.b16 %v460
    %v530 = vunpack.c.l.b16 %v461
    %v531 = vunpack.c.h.b16 %v461
    %v532 = vunpack.c.l.b16 %v462
    %v533 = vunpack.c.h.b16 %v462
    %v534 = vunpack.c.l.b16 %v463
    %v535 = vunpack.c.h.b16 %v463
    %v536 = vunpack.c.l.b16 %v464
    %v537 = vunpack.c.h.b16 %v464
    %v538 = vunpack.c.l.b16 %v465
    %v539 = vunpack.c.h.b16 %v465
    %v540 = vunpack.c.l.b16 %v466
    %v541 = vunpack.c.h.b16 %v466
    %v542 = vunpack.c.l.b16 %v467
    %v543 = vunpack.c.h.b16 %v467
    %v544 = vunpack.c.l.b16 %v468
    %v545 = vunpack.c.h.b16 %v468
    %v546 = vunpack.c.l.b16 %v469
    %v547 = vunpack.c.h.b16 %v469
    %v548 = vunpack.c.l.b16 %v470
    %v549 = vunpack.c.h.b16 %v470
    %v550 = vunpack.c.l.b16 %v471
    %v551 = vunpack.c.h.b16 %v471
    %v552 = vunpack.c.l.b16 %v472
    %v553 = vunpack.c.h.b16 %v472
    %v554 = vunpack.c.l.b16 %v473
    %v555 = vunpack.c.h.b16 %v473
    %v556 = vunpack.c.l.b16 %v474
    %v557 = vunpack.c.h.b16 %v474
    %v558 = vunpack.c.l.b16 %v475
    %v559 = vunpack.c.h.b16 %v475
    %v560 = vunpack.c.l.b16 %v476
    %v561 = vunpack.c.h.b16 %v476
    %v562 = vunpack.c.l.b16 %v477
    %v563 = vunpack.c.h.b16 %v477
    %v564 = vunpack.c.l.b16 %v478
    %v565 = vunpack.c.h.b16 %v478
    %v566 = vunpack.c.l.b16 %v479
    %v567 = vunpack.c.h.b16 %v479
    %v568 = vunpack.c.l.b16 %v480
    %v569 = vunpack.c.h.b16 %v480
    %v570 = vunpack.c.l.b16 %v481
    %v571 = vunpack.c.h.b16 %v481
    %v572 = vunpack.c.l.b16 %v482
    %v573 = vunpack.c.h.b16 %v482
    %v574 = vunpack.c.l.b16 %v483
    %v575 = vunpack.c.h.b16 %v483
    %v576 = vunpack.c.l.b16 %v484
    %v577 = vunpack.c.h.b16 %v484
    %v578 = vunpack.c.l.b16 %v485
    %v579 = vunpack.c.h.b16 %v485
    %v580 = vunpack.c.l.b16 %v486
    %v581 = vunpack.c.h.b16 %v486
    %v582 = vunpack.c.l.b16 %v487
    %v583 = vunpack.c.h.b16 %v487
    %v584 = vpack.c.b16 %v524, %v520
    %v585 = vpack.c.b16 %v525, %v521
    %v586 = vpack.c.b16 %v526, %v522
    %v587 = vpack.c.b16 %v527, %v523
    %v588 = vpack.c.b16 %v532, %v528
    %v589 = vpack.c.b16 %v533, %v529
    %v590 = vpack.c.b16 %v534, %v530
    %v591 = vpack.c.b16 %v535, %v531
    %v592 = vpack.c.b16 %v540, %v536
    %v593 = vpack.c.b16 %v541, %v537
    %v594 = vpack.c.b16 %v542, %v538
    %v595 = vpack.c.b16 %v543, %v539
    %v596 = vpack.c.b16 %v548, %v544
    %v597 = vpack.c.b16 %v549, %v545
    %v598 = vpack.c.b16 %v550, %v546
    %v599 = vpack.c.b16 %v551, %v547
    %v600 = vpack.c.b16 %v556, %v552
    %v601 = vpack.c.b16 %v557, %v553
    %v602 = vpack.c.b16 %v558, %v554
    %v603 = vpack.c.b16 %v559, %v555
    %v604 = vpack.c.b16 %v564, %v560
    %v605 = vpack.c.b16 %v565, %v561
    %v606 = vpack.c.b16 %v566, %v562
    %v607 = vpack.c.b16 %v567, %v563
    %v608 = vpack.c.b16 %v572, %v568
    %v609 = vpack.c.b16 %v573, %v569
    %v610 = vpack.c.b16 %v574, %v570
    %v611 = vpack.c.b16 %v575, %v571
    %v612 = vpack.c.b16 %v580, %v576
    %v613 = vpack.c.b16 %v581, %v577
    %v614 = vpack.c.b16 %v582, %v578
    %v615 = vpack.c.b16 %v583, %v579
    %648 = vmatpush.bf16.msra.mxu0 %v612
    %649 = vmatpush.bf16.msra.mxu0 %v608
    %650 = vmatpush.bf16.msra.mxu0 %v604
    %651 = vmatpush.bf16.msra.mxu0 %v600
    %652 = vmatpush.bf16.msra.mxu0 %v596
    %653 = vmatpush.bf16.msra.mxu0 %v592
    %654 = vmatpush.bf16.msra.mxu0 %v588
    %655 = vmatpush.bf16.msra.mxu0 %v584
    %656 = vmatmul.bf16.gmra.mxu0 %v454
    %v657 = vpop.f32.mrf.mxu0
    %v658 = vadd.f32 0.0, %v657
    %v659 = vpop.f32.mrf.mxu0
    %v660 = vadd.f32 0.0, %v659
    %661 = vmatmul.bf16.gmra.mxu0 %v455
    %v662 = vpop.f32.mrf.mxu0
    %v663 = vadd.f32 0.0, %v662
    %v664 = vpop.f32.mrf.mxu0
    %v665 = vadd.f32 0.0, %v664
    %666 = vdwg.mxu0
    %667 = vmatpush.bf16.msra.mxu0 %v613
    %668 = vmatpush.bf16.msra.mxu0 %v609
    %669 = vmatpush.bf16.msra.mxu0 %v605
    %670 = vmatpush.bf16.msra.mxu0 %v601
    %671 = vmatpush.bf16.msra.mxu0 %v597
    %672 = vmatpush.bf16.msra.mxu0 %v593
    %673 = vmatpush.bf16.msra.mxu0 %v589
    %674 = vmatpush.bf16.msra.mxu0 %v585
    %675 = vmatmul.bf16.gmra.mxu0 %v454
    %v676 = vpop.f32.mrf.mxu0
    %v677 = vadd.f32 0.0, %v676
    %v678 = vpop.f32.mrf.mxu0
    %v679 = vadd.f32 0.0, %v678
    %680 = vmatmul.bf16.gmra.mxu0 %v455
    %v681 = vpop.f32.mrf.mxu0
    %v682 = vadd.f32 0.0, %v681
    %v683 = vpop.f32.mrf.mxu0
    %v684 = vadd.f32 0.0, %v683
    %685 = vdwg.mxu0
    %686 = vmatpush.bf16.msra.mxu0 %v614
    %687 = vmatpush.bf16.msra.mxu0 %v610
    %688 = vmatpush.bf16.msra.mxu0 %v606
    %689 = vmatpush.bf16.msra.mxu0 %v602
    %690 = vmatpush.bf16.msra.mxu0 %v598
    %691 = vmatpush.bf16.msra.mxu0 %v594
    %692 = vmatpush.bf16.msra.mxu0 %v590
    %693 = vmatpush.bf16.msra.mxu0 %v586
    %694 = vmatmul.bf16.gmra.mxu0 %v454
    %v695 = vpop.f32.mrf.mxu0
    %v696 = vadd.f32 0.0, %v695
    %v697 = vpop.f32.mrf.mxu0
    %v698 = vadd.f32 0.0, %v697
    %699 = vmatmul.bf16.gmra.mxu0 %v455
    %v700 = vpop.f32.mrf.mxu0
    %v701 = vadd.f32 0.0, %v700
    %v702 = vpop.f32.mrf.mxu0
    %v703 = vadd.f32 0.0, %v702
    %704 = vdwg.mxu0
    %705 = vmatpush.bf16.msra.mxu0 %v615
    %706 = vmatpush.bf16.msra.mxu0 %v611
    %707 = vmatpush.bf16.msra.mxu0 %v607
    %708 = vmatpush.bf16.msra.mxu0 %v603
    %709 = vmatpush.bf16.msra.mxu0 %v599
    %710 = vmatpush.bf16.msra.mxu0 %v595
    %711 = vmatpush.bf16.msra.mxu0 %v591
    %712 = vmatpush.bf16.msra.mxu0 %v587
    %713 = vmatmul.bf16.gmra.mxu0 %v454
    %v714 = vpop.f32.mrf.mxu0
    %v715 = vadd.f32 0.0, %v714
    %v716 = vpop.f32.mrf.mxu0
    %v717 = vadd.f32 0.0, %v716
    %718 = vmatmul.bf16.gmra.mxu0 %v455
    %v719 = vpop.f32.mrf.mxu0
    %v720 = vadd.f32 0.0, %v719
    %v721 = vpop.f32.mrf.mxu0
    %v722 = vadd.f32 0.0, %v721
    %723 = vdwg.mxu0
    %v724 = vpack.c.bf16 %v660, %v658
    %v725 = vpack.c.bf16 %v665, %v663
    %726 = vmatpush.bf16.msra.mxu0 0
    %727 = vmatpush.bf16.msra.mxu0 0
    %728 = vmatpush.bf16.msra.mxu0 0
    %729 = vmatpush.bf16.msra.mxu0 0
    %730 = vmatpush.bf16.msra.mxu0 0
    %731 = vmatpush.bf16.msra.mxu0 0
    %732 = vmatpush.bf16.msra.mxu0 %v725
    %733 = vmatpush.bf16.msra.mxu0 %v724
    %734 = vmatmul.bf16.gmra.mxu0 %v422
    %v735 = vpop.f32.mrf.mxu0
    %v736 = vadd.f32 %v677, %v735
    %v737 = vpop.f32.mrf.mxu0
    %v738 = vadd.f32 %v679, %v737
    %739 = vmatmul.bf16.gmra.mxu0 %v425
    %v740 = vpop.f32.mrf.mxu0
    %v741 = vadd.f32 %v682, %v740
    %v742 = vpop.f32.mrf.mxu0
    %v743 = vadd.f32 %v684, %v742
    %744 = vdwg.mxu0
    %v745 = vld [vmem:[#allocation7] sm:$0x1]
    %v747 = vperm.slane %v745, 0
    %v749 = vadd.f32 %v736, %v747
    %v750 = vadd.f32 %v738, %v747
    %v751 = vadd.f32 %v741, %v747
    %v752 = vadd.f32 %v743, %v747
    %v753 = vld [vmem:[#allocation16] sm:$0x3]
    %v755 = vperm.slane %v753, 0
    %v756 = vperm.slane %v753, 1
    %v759 = vadd.f32 %v696, %v755
    %v760 = vadd.f32 %v715, %v756
    %v761 = vadd.f32 %v698, %v755
    %v762 = vadd.f32 %v717, %v756
    %v763 = vadd.f32 %v701, %v755
    %v764 = vadd.f32 %v720, %v756
    %v765 = vadd.f32 %v703, %v755
    %v766 = vadd.f32 %v722, %v756
    %v767 = vld [vmem:[%s10] sm:$0xf]
    %v768 = vld [vmem:[%s10 + $0x4] sm:$0xf]
    %v769 = vld [vmem:[%s10 + $0x8] sm:$0xf]
    %v770 = vld [vmem:[%s10 + $0xc] sm:$0xf]
    %v771 = vld [vmem:[%s10 + $0x10] sm:$0xf]
    %v772 = vld [vmem:[%s10 + $0x14] sm:$0xf]
    %v773 = vld [vmem:[%s10 + $0x18] sm:$0xf]
    %v774 = vld [vmem:[%s10 + $0x1c] sm:$0xf]
    %v775 = vld [vmem:[%s10 + $0x20] sm:$0xf]
    %v776 = vld [vmem:[%s10 + $0x24] sm:$0xf]
    %v777 = vld [vmem:[%s10 + $0x28] sm:$0xf]
    %v778 = vld [vmem:[%s10 + $0x2c] sm:$0xf]
    %v779 = vld [vmem:[%s10 + $0x30] sm:$0xf]
    %v780 = vld [vmem:[%s10 + $0x34] sm:$0xf]
    %v781 = vld [vmem:[%s10 + $0x38] sm:$0xf]
    %v782 = vld [vmem:[%s10 + $0x3c] sm:$0xf]
    %v799 = vunpack.c.l.b16 %v767
    %v800 = vunpack.c.l.b16 %v768
    %v801 = vunpack.c.l.b16 %v769
    %v802 = vunpack.c.l.b16 %v770
    %v803 = vunpack.c.l.b16 %v771
    %v804 = vunpack.c.l.b16 %v772
    %v805 = vunpack.c.l.b16 %v773
    %v806 = vunpack.c.l.b16 %v774
    %v807 = vunpack.c.l.b16 %v775
    %v808 = vunpack.c.l.b16 %v776
    %v809 = vunpack.c.l.b16 %v777
    %v810 = vunpack.c.l.b16 %v778
    %v811 = vunpack.c.l.b16 %v779
    %v812 = vunpack.c.l.b16 %v780
    %v813 = vunpack.c.l.b16 %v781
    %v814 = vunpack.c.l.b16 %v782
    %v815 = vpack.c.b16 %v800, %v799
    %v816 = vpack.c.b16 %v802, %v801
    %v817 = vpack.c.b16 %v804, %v803
    %v818 = vpack.c.b16 %v806, %v805
    %v819 = vpack.c.b16 %v808, %v807
    %v820 = vpack.c.b16 %v810, %v809
    %v821 = vpack.c.b16 %v812, %v811
    %v822 = vpack.c.b16 %v814, %v813
    %831 = vmatpush.bf16.msra.mxu0 %v822
    %832 = vmatpush.bf16.msra.mxu0 %v821
    %833 = vmatpush.bf16.msra.mxu0 %v820
    %834 = vmatpush.bf16.msra.mxu0 %v819
    %835 = vmatpush.bf16.msra.mxu0 %v818
    %836 = vmatpush.bf16.msra.mxu0 %v817
    %837 = vmatpush.bf16.msra.mxu0 %v816
    %838 = vmatpush.bf16.msra.mxu0 %v815
    %839 = vmatmul.bf16.gmra.mxu0 %v278
    %v840 = vpop.f32.mrf.mxu0
    %v841 = vadd.f32 0.0, %v840
    %v842 = vpop.f32.mrf.mxu0
    %v843 = vadd.f32 0.0, %v842
    %844 = vmatmul.bf16.gmra.mxu0 %v279
    %v845 = vpop.f32.mrf.mxu0
    %v846 = vadd.f32 0.0, %v845
    %v847 = vpop.f32.mrf.mxu0
    %v848 = vadd.f32 0.0, %v847
    %849 = vdwg.mxu0
    %v850 = vadd.f32 %v759, %v841
    %v851 = vadd.f32 %v761, %v843
    %v852 = vadd.f32 %v763, %v846
    %v853 = vadd.f32 %v765, %v848
    %v854 = vpack.c.bf16 %v750, %v749
    %v855 = vpack.c.bf16 %v752, %v751
    %856 = vmatpush.bf16.xpose.msra.mxu0 0
    %857 = vmatpush.bf16.xpose.msra.mxu0 0
    %858 = vmatpush.bf16.xpose.msra.mxu0 0
    %859 = vmatpush.bf16.xpose.msra.mxu0 0
    %860 = vmatpush.bf16.xpose.msra.mxu0 0
    %861 = vmatpush.bf16.xpose.msra.mxu0 0
    %862 = vmatpush.bf16.xpose.msra.mxu0 %v855
    %863 = vmatpush.bf16.xpose.msra.mxu0 %v854
    %864 = vmatmul.bf16.gmra.mxu0 %v854
    %v865 = vpop.f32.mrf.mxu0
    %v866 = vadd.f32 0.0, %v865
    %v867 = vpop.f32.mrf.mxu0
    %v868 = vadd.f32 0.0, %v867
    %869 = vmatmul.bf16.gmra.mxu0 %v855
    %v870 = vpop.f32.mrf.mxu0
    %v871 = vadd.f32 0.0, %v870
    %v872 = vpop.f32.mrf.mxu0
    %v873 = vadd.f32 0.0, %v872
    %874 = vdwg.mxu0
    %v875 = vsel %vm270, %v866, -9e+15
    %v876 = vsel %vm271, %v868, -9e+15
    %v877 = vsel %vm272, %v871, -9e+15
    %v878 = vsel %vm273, %v873, -9e+15
    %v879 = vsel %vm420, %v875, -inf
    %880 = vmax.xlane.f32.xlu0 %v879
    %v881 = vpop.xlane.xlu0 %880
    %v882 = vsel %vm420, %v876, -inf
    %883 = vmax.xlane.f32.xlu0 %v882
    %v884 = vpop.xlane.xlu0 %883
    %v885 = vsel %vm420, %v877, -inf
    %886 = vmax.xlane.f32.xlu0 %v885
    %v887 = vpop.xlane.xlu0 %886
    %v888 = vsel %vm420, %v878, -inf
    %889 = vmax.xlane.f32.xlu0 %v888
    %v890 = vpop.xlane.xlu0 %889
    %v891 = vsub.f32 %v875, %v881
    %v892 = vsub.f32 %v876, %v884
    %v893 = vsub.f32 %v877, %v887
    %v894 = vsub.f32 %v878, %v890
    %v895 = vmul.f32 %v891, 1.442695
    %v896 = vpow.pop %v895
    %v897 = vmul.f32 %v892, 1.442695
    %v898 = vpow.pop %v897
    %v899 = vmul.f32 %v893, 1.442695
    %v900 = vpow.pop %v899
    %v901 = vmul.f32 %v894, 1.442695
    %v902 = vpow.pop %v901
    %v903 = vsel %vm420, %v896, 0.0
    %904 = vadd.xlane.f32.xlu0 %v903
    %v905 = vpop.xlane.xlu0 %904
    %v906 = vsel %vm420, %v898, 0.0
    %907 = vadd.xlane.f32.xlu0 %v906
    %v908 = vpop.xlane.xlu0 %907
    %v909 = vsel %vm420, %v900, 0.0
    %910 = vadd.xlane.f32.xlu0 %v909
    %v911 = vpop.xlane.xlu0 %910
    %v912 = vsel %vm420, %v902, 0.0
    %913 = vadd.xlane.f32.xlu0 %v912
    %v914 = vpop.xlane.xlu0 %913
    %v915 = vrcp.pop %v905
    %v916 = vmul.f32 %v905, %v915
    %v917 = vsub.f32 1.0, %v916
    %v918 = vmul.f32 %v915, %v917
    %v919 = vadd.f32 %v915, %v918
    %vm920 = vweird.f32 %v905
    %vm921 = vweird.f32 %v915
    %vm922 = vmor %vm920, %vm921
    %v923 = vsel %vm922, %v915, %v919
    %v924 = vand.u32 2147483647, %v905
    %vm925 = vcmp.eq.f32.partialorder %v924, 8.507059e+37
    %v926 = vand.u32 %v905, 2147483648
    %v927 = vor.u32 1.1754944e-38, %v926
    %v928 = vsel %vm925, %v927, %v923
    %v929 = vmul.f32 %v896, %v928
    %v930 = vrcp.pop %v908
    %v931 = vmul.f32 %v908, %v930
    %v932 = vsub.f32 1.0, %v931
    %v933 = vmul.f32 %v930, %v932
    %v934 = vadd.f32 %v930, %v933
    %vm935 = vweird.f32 %v908
    %vm936 = vweird.f32 %v930
    %vm937 = vmor %vm935, %vm936
    %v938 = vsel %vm937, %v930, %v934
    %v939 = vand.u32 2147483647, %v908
    %vm940 = vcmp.eq.f32.partialorder %v939, 8.507059e+37
    %v941 = vand.u32 %v908, 2147483648
    %v942 = vor.u32 1.1754944e-38, %v941
    %v943 = vsel %vm940, %v942, %v938
    %v944 = vmul.f32 %v898, %v943
    %v945 = vrcp.pop %v911
    %v946 = vmul.f32 %v911, %v945
    %v947 = vsub.f32 1.0, %v946
    %v948 = vmul.f32 %v945, %v947
    %v949 = vadd.f32 %v945, %v948
    %vm950 = vweird.f32 %v911
    %vm951 = vweird.f32 %v945
    %vm952 = vmor %vm950, %vm951
    %v953 = vsel %vm952, %v945, %v949
    %v954 = vand.u32 2147483647, %v911
    %vm955 = vcmp.eq.f32.partialorder %v954, 8.507059e+37
    %v956 = vand.u32 %v911, 2147483648
    %v957 = vor.u32 1.1754944e-38, %v956
    %v958 = vsel %vm955, %v957, %v953
    %v959 = vmul.f32 %v900, %v958
    %v960 = vrcp.pop %v914
    %v961 = vmul.f32 %v914, %v960
    %v962 = vsub.f32 1.0, %v961
    %v963 = vmul.f32 %v960, %v962
    %v964 = vadd.f32 %v960, %v963
    %vm965 = vweird.f32 %v914
    %vm966 = vweird.f32 %v960
    %vm967 = vmor %vm965, %vm966
    %v968 = vsel %vm967, %v960, %v964
    %v969 = vand.u32 2147483647, %v914
    %vm970 = vcmp.eq.f32.partialorder %v969, 8.507059e+37
    %v971 = vand.u32 %v914, 2147483648
    %v972 = vor.u32 1.1754944e-38, %v971
    %v973 = vsel %vm970, %v972, %v968
    %v974 = vmul.f32 %v902, %v973
    %v975 = vpack.c.bf16 %v851, %v850
    %v976 = vpack.c.bf16 %v853, %v852
    %v977 = vpack.c.bf16 %v762, %v760
    %v978 = vpack.c.bf16 %v766, %v764
    %979 = vmatpush.bf16.xpose.msra.mxu0 0
    %980 = vmatpush.bf16.xpose.msra.mxu0 0
    %981 = vmatpush.bf16.xpose.msra.mxu0 0
    %982 = vmatpush.bf16.xpose.msra.mxu0 0
    %983 = vmatpush.bf16.xpose.msra.mxu0 0
    %984 = vmatpush.bf16.xpose.msra.mxu0 0
    %985 = vmatpush.bf16.xpose.msra.mxu0 %v978
    %986 = vmatpush.bf16.xpose.msra.mxu0 %v977
    %987 = vmatmul.bf16.gmra.mxu0 %v975
    %v988 = vpop.f32.mrf.mxu0
    %v989 = vadd.f32 0.0, %v988
    %v990 = vpop.f32.mrf.mxu0
    %v991 = vadd.f32 0.0, %v990
    %992 = vmatmul.bf16.gmra.mxu0 %v976
    %v993 = vpop.f32.mrf.mxu0
    %v994 = vadd.f32 0.0, %v993
    %v995 = vpop.f32.mrf.mxu0
    %v996 = vadd.f32 0.0, %v995
    %997 = vdwg.mxu0
    %v998 = vmul.f32 %v989, 0.17677669
    %v999 = vmul.f32 %v991, 0.17677669
    %v1000 = vmul.f32 %v994, 0.17677669
    %v1001 = vmul.f32 %v996, 0.17677669
    %v1002 = vsel %vm270, -1e+09, %v998
    %v1003 = vsel %vm271, -1e+09, %v999
    %v1004 = vsel %vm272, -1e+09, %v1000
    %v1005 = vsel %vm273, -1e+09, %v1001
    %v1006 = vsel %vm420, %v1002, -inf
    %1007 = vmax.xlane.f32.xlu0 %v1006
    %v1008 = vpop.xlane.xlu0 %1007
    %v1009 = vsel %vm420, %v1003, -inf
    %1010 = vmax.xlane.f32.xlu0 %v1009
    %v1011 = vpop.xlane.xlu0 %1010
    %v1012 = vsel %vm420, %v1004, -inf
    %1013 = vmax.xlane.f32.xlu0 %v1012
    %v1014 = vpop.xlane.xlu0 %1013
    %v1015 = vsel %vm420, %v1005, -inf
    %1016 = vmax.xlane.f32.xlu0 %v1015
    %v1017 = vpop.xlane.xlu0 %1016
    %v1018 = vsub.f32 %v1002, %v1008
    %v1019 = vsub.f32 %v1003, %v1011
    %v1020 = vsub.f32 %v1004, %v1014
    %v1021 = vsub.f32 %v1005, %v1017
    %v1022 = vmul.f32 %v1018, 1.442695
    %v1023 = vpow.pop %v1022
    %v1024 = vmul.f32 %v1019, 1.442695
    %v1025 = vpow.pop %v1024
    %v1026 = vmul.f32 %v1020, 1.442695
    %v1027 = vpow.pop %v1026
    %v1028 = vmul.f32 %v1021, 1.442695
    %v1029 = vpow.pop %v1028
    %v1030 = vsel %vm420, %v1023, 0.0
    %1031 = vadd.xlane.f32.xlu0 %v1030
    %v1032 = vpop.xlane.xlu0 %1031
    %v1033 = vsel %vm420, %v1025, 0.0
    %1034 = vadd.xlane.f32.xlu0 %v1033
    %v1035 = vpop.xlane.xlu0 %1034
    %v1036 = vsel %vm420, %v1027, 0.0
    %1037 = vadd.xlane.f32.xlu0 %v1036
    %v1038 = vpop.xlane.xlu0 %1037
    %v1039 = vsel %vm420, %v1029, 0.0
    %1040 = vadd.xlane.f32.xlu0 %v1039
    %v1041 = vpop.xlane.xlu0 %1040
    %v1042 = vrcp.pop %v1032
    %v1043 = vrcp.pop %v1035
    %v1044 = vrcp.pop %v1038
    %v1045 = vrcp.pop %v1041
    %v1046 = vmul.f32 %v1023, %v1042
    %v1047 = vmul.f32 %v1025, %v1043
    %v1048 = vmul.f32 %v1027, %v1044
    %v1049 = vmul.f32 %v1029, %v1045
    %v1050 = vpack.c.bf16 %v1047, %v1046
    %v1051 = vpack.c.bf16 %v1049, %v1048
    %v1053 = vsel %vm420, %v1050, 0
    %v1056 = vsel %vm420, %v1051, 0
    %1058 = vmatpush.bf16.msra.mxu0 0
    %1059 = vmatpush.bf16.msra.mxu0 0
    %1060 = vmatpush.bf16.msra.mxu0 0
    %1061 = vmatpush.bf16.msra.mxu0 0
    %1062 = vmatpush.bf16.msra.mxu0 0
    %1063 = vmatpush.bf16.msra.mxu0 0
    %1064 = vmatpush.bf16.msra.mxu0 %v976
    %1065 = vmatpush.bf16.msra.mxu0 %v975
    %1066 = vmatmul.bf16.gmra.mxu0 %v1053
    %v1067 = vpop.f32.mrf.mxu0
    %v1068 = vadd.f32 0.0, %v1067
    %v1069 = vpop.f32.mrf.mxu0
    %v1070 = vadd.f32 0.0, %v1069
    %1071 = vmatmul.bf16.gmra.mxu0 %v1056
    %v1072 = vpop.f32.mrf.mxu0
    %v1073 = vadd.f32 0.0, %v1072
    %v1074 = vpop.f32.mrf.mxu0
    %v1075 = vadd.f32 0.0, %v1074
    %1076 = vdwg.mxu0
    %v1077 = vadd.f32 %v1068, %v450
    %v1078 = vadd.f32 %v1070, %v451
    %v1079 = vadd.f32 %v1073, %v452
    %v1080 = vadd.f32 %v1075, %v453
    %v1082 = vsel %vm420, %v280, 0
    %v1085 = vsel %vm420, %v281, 0
    %v1088 = vsel %vm420, %v282, 0
    %v1091 = vsel %vm420, %v283, 0
    %1093 = vmatpush.msra.mxu0 0.0
    %1094 = vmatpush.msra.mxu0 0.0
    %1095 = vmatpush.msra.mxu0 0.0
    %1096 = vmatpush.msra.mxu0 0.0
    %1097 = vmatpush.msra.mxu0 0.0
    %1098 = vmatpush.msra.mxu0 0.0
    %1099 = vmatpush.msra.mxu0 0.0
    %1100 = vmatpush.msra.mxu0 0.0
    %1101 = vmatpush.msra.mxu0 0.0
    %1102 = vmatpush.msra.mxu0 0.0
    %1103 = vmatpush.msra.mxu0 0.0
    %1104 = vmatpush.msra.mxu0 0.0
    %1105 = vmatpush.msra.mxu0 %v283
    %1106 = vmatpush.msra.mxu0 %v282
    %1107 = vmatpush.msra.mxu0 %v281
    %1108 = vmatpush.msra.mxu0 %v280
    %1109 = vmatmul.f32.gmra.mxu0 %v1082
    %v1110 = vpop.f32.mrf.mxu0
    %v1111 = vadd.f32 0.0, %v1110
    %1112 = vmatmul.f32.gmra.mxu0 %v1085
    %v1113 = vpop.f32.mrf.mxu0
    %v1114 = vadd.f32 0.0, %v1113
    %1115 = vmatmul.f32.gmra.mxu0 %v1088
    %v1116 = vpop.f32.mrf.mxu0
    %v1117 = vadd.f32 0.0, %v1116
    %1118 = vmatmul.f32.gmra.mxu0 %v1091
    %v1119 = vpop.f32.mrf.mxu0
    %v1120 = vadd.f32 0.0, %v1119
    %1121 = vdwg.mxu0
    %v1122 = vadd.f32 %v280, %v1111
    %v1123 = vadd.f32 %v281, %v1114
    %v1124 = vadd.f32 %v282, %v1117
    %v1125 = vadd.f32 %v283, %v1120
    %v1126 = vpack.c.bf16 %v1078, %v1077
    %v1127 = vpack.c.bf16 %v1080, %v1079
    %v1128 = vld [vmem:[#allocation22] sm:$0xff]
    %v1129 = vld [vmem:[#allocation22 + $0x8] sm:$0xff]
    %v1130 = vld [vmem:[#allocation22 + $0x10] sm:$0xff]
    %v1131 = vld [vmem:[#allocation22 + $0x18] sm:$0xff]
    %v1132 = vld [vmem:[#allocation22 + $0x20] sm:$0xff]
    %v1133 = vld [vmem:[#allocation22 + $0x28] sm:$0xff]
    %v1134 = vld [vmem:[#allocation22 + $0x30] sm:$0xff]
    %v1135 = vld [vmem:[#allocation22 + $0x38] sm:$0xff]
    %v1136 = vld [vmem:[#allocation22 + $0x40] sm:$0xff]
    %v1137 = vld [vmem:[#allocation22 + $0x48] sm:$0xff]
    %v1138 = vld [vmem:[#allocation22 + $0x50] sm:$0xff]
    %v1139 = vld [vmem:[#allocation22 + $0x58] sm:$0xff]
    %v1140 = vld [vmem:[#allocation22 + $0x60] sm:$0xff]
    %v1141 = vld [vmem:[#allocation22 + $0x68] sm:$0xff]
    %v1142 = vld [vmem:[#allocation22 + $0x70] sm:$0xff]
    %v1143 = vld [vmem:[#allocation22 + $0x78] sm:$0xff]
    %v1160 = vunpack.c.l.b16 %v1128
    %v1161 = vunpack.c.h.b16 %v1128
    %v1162 = vunpack.c.l.b16 %v1129
    %v1163 = vunpack.c.h.b16 %v1129
    %v1164 = vunpack.c.l.b16 %v1130
    %v1165 = vunpack.c.h.b16 %v1130
    %v1166 = vunpack.c.l.b16 %v1131
    %v1167 = vunpack.c.h.b16 %v1131
    %v1168 = vunpack.c.l.b16 %v1132
    %v1169 = vunpack.c.h.b16 %v1132
    %v1170 = vunpack.c.l.b16 %v1133
    %v1171 = vunpack.c.h.b16 %v1133
    %v1172 = vunpack.c.l.b16 %v1134
    %v1173 = vunpack.c.h.b16 %v1134
    %v1174 = vunpack.c.l.b16 %v1135
    %v1175 = vunpack.c.h.b16 %v1135
    %v1176 = vunpack.c.l.b16 %v1136
    %v1177 = vunpack.c.h.b16 %v1136
    %v1178 = vunpack.c.l.b16 %v1137
    %v1179 = vunpack.c.h.b16 %v1137
    %v1180 = vunpack.c.l.b16 %v1138
    %v1181 = vunpack.c.h.b16 %v1138
    %v1182 = vunpack.c.l.b16 %v1139
    %v1183 = vunpack.c.h.b16 %v1139
    %v1184 = vunpack.c.l.b16 %v1140
    %v1185 = vunpack.c.h.b16 %v1140
    %v1186 = vunpack.c.l.b16 %v1141
    %v1187 = vunpack.c.h.b16 %v1141
    %v1188 = vunpack.c.l.b16 %v1142
    %v1189 = vunpack.c.h.b16 %v1142
    %v1190 = vunpack.c.l.b16 %v1143
    %v1191 = vunpack.c.h.b16 %v1143
    %v1192 = vpack.c.b16 %v1162, %v1160
    %v1193 = vpack.c.b16 %v1163, %v1161
    %v1194 = vpack.c.b16 %v1166, %v1164
    %v1195 = vpack.c.b16 %v1167, %v1165
    %v1196 = vpack.c.b16 %v1170, %v1168
    %v1197 = vpack.c.b16 %v1171, %v1169
    %v1198 = vpack.c.b16 %v1174, %v1172
    %v1199 = vpack.c.b16 %v1175, %v1173
    %v1200 = vpack.c.b16 %v1178, %v1176
    %v1201 = vpack.c.b16 %v1179, %v1177
    %v1202 = vpack.c.b16 %v1182, %v1180
    %v1203 = vpack.c.b16 %v1183, %v1181
    %v1204 = vpack.c.b16 %v1186, %v1184
    %v1205 = vpack.c.b16 %v1187, %v1185
    %v1206 = vpack.c.b16 %v1190, %v1188
    %v1207 = vpack.c.b16 %v1191, %v1189
    %1224 = vmatpush.bf16.msra.mxu0 %v1206
    %1225 = vmatpush.bf16.msra.mxu0 %v1204
    %1226 = vmatpush.bf16.msra.mxu0 %v1202
    %1227 = vmatpush.bf16.msra.mxu0 %v1200
    %1228 = vmatpush.bf16.msra.mxu0 %v1198
    %1229 = vmatpush.bf16.msra.mxu0 %v1196
    %1230 = vmatpush.bf16.msra.mxu0 %v1194
    %1231 = vmatpush.bf16.msra.mxu0 %v1192
    %1232 = vmatmul.bf16.gmra.mxu0 %v1126
    %v1233 = vpop.f32.mrf.mxu0
    %v1234 = vadd.f32 0.0, %v1233
    %v1235 = vpop.f32.mrf.mxu0
    %v1236 = vadd.f32 0.0, %v1235
    %1237 = vmatmul.bf16.gmra.mxu0 %v1127
    %v1238 = vpop.f32.mrf.mxu0
    %v1239 = vadd.f32 0.0, %v1238
    %v1240 = vpop.f32.mrf.mxu0
    %v1241 = vadd.f32 0.0, %v1240
    %1242 = vdwg.mxu0
    %1243 = vmatpush.bf16.msra.mxu0 %v1207
    %1244 = vmatpush.bf16.msra.mxu0 %v1205
    %1245 = vmatpush.bf16.msra.mxu0 %v1203
    %1246 = vmatpush.bf16.msra.mxu0 %v1201
    %1247 = vmatpush.bf16.msra.mxu0 %v1199
    %1248 = vmatpush.bf16.msra.mxu0 %v1197
    %1249 = vmatpush.bf16.msra.mxu0 %v1195
    %1250 = vmatpush.bf16.msra.mxu0 %v1193
    %1251 = vmatmul.bf16.gmra.mxu0 %v1126
    %v1252 = vpop.f32.mrf.mxu0
    %v1253 = vadd.f32 0.0, %v1252
    %v1254 = vpop.f32.mrf.mxu0
    %v1255 = vadd.f32 0.0, %v1254
    %1256 = vmatmul.bf16.gmra.mxu0 %v1127
    %v1257 = vpop.f32.mrf.mxu0
    %v1258 = vadd.f32 0.0, %v1257
    %v1259 = vpop.f32.mrf.mxu0
    %v1260 = vadd.f32 0.0, %v1259
    %1261 = vdwg.mxu0
    %v1262 = vpack.c.bf16 %v1236, %v1234
    %v1263 = vpack.c.bf16 %v1241, %v1239
    %1264 = vmatpush.bf16.msra.mxu0 0
    %1265 = vmatpush.bf16.msra.mxu0 0
    %1266 = vmatpush.bf16.msra.mxu0 0
    %1267 = vmatpush.bf16.msra.mxu0 0
    %1268 = vmatpush.bf16.msra.mxu0 0
    %1269 = vmatpush.bf16.msra.mxu0 0
    %1270 = vmatpush.bf16.msra.mxu0 %v1263
    %1271 = vmatpush.bf16.msra.mxu0 %v1262
    %1272 = vmatmul.bf16.gmra.mxu0 %v422
    %v1273 = vpop.f32.mrf.mxu0
    %v1274 = vadd.f32 %v1253, %v1273
    %v1275 = vpop.f32.mrf.mxu0
    %v1276 = vadd.f32 %v1255, %v1275
    %1277 = vmatmul.bf16.gmra.mxu0 %v425
    %v1278 = vpop.f32.mrf.mxu0
    %v1279 = vadd.f32 %v1258, %v1278
    %v1280 = vpop.f32.mrf.mxu0
    %v1281 = vadd.f32 %v1260, %v1280
    %1282 = vdwg.mxu0
    %v1283 = vld [vmem:[#allocation23] sm:$0x1]
    %v1285 = vperm.slane %v1283, 0
    %v1287 = vadd.f32 %v1274, %v1285
    %v1288 = vadd.f32 %v1276, %v1285
    %v1289 = vadd.f32 %v1279, %v1285
    %v1290 = vadd.f32 %v1281, %v1285
    %v1291 = vpack.c.bf16 %v1288, %v1287
    %v1292 = vpack.c.bf16 %v1290, %v1289
    %v1293 = vld [vmem:[#allocation17] sm:$0xff]
    %v1294 = vld [vmem:[#allocation17 + $0x8] sm:$0xff]
    %v1295 = vld [vmem:[#allocation17 + $0x10] sm:$0xff]
    %v1296 = vld [vmem:[#allocation17 + $0x18] sm:$0xff]
    %v1297 = vld [vmem:[#allocation17 + $0x20] sm:$0xff]
    %v1298 = vld [vmem:[#allocation17 + $0x28] sm:$0xff]
    %v1299 = vld [vmem:[#allocation17 + $0x30] sm:$0xff]
    %v1300 = vld [vmem:[#allocation17 + $0x38] sm:$0xff]
    %v1301 = vld [vmem:[#allocation17 + $0x40] sm:$0xff]
    %v1302 = vld [vmem:[#allocation17 + $0x48] sm:$0xff]
    %v1303 = vld [vmem:[#allocation17 + $0x50] sm:$0xff]
    %v1304 = vld [vmem:[#allocation17 + $0x58] sm:$0xff]
    %v1305 = vld [vmem:[#allocation17 + $0x60] sm:$0xff]
    %v1306 = vld [vmem:[#allocation17 + $0x68] sm:$0xff]
    %v1307 = vld [vmem:[#allocation17 + $0x70] sm:$0xff]
    %v1308 = vld [vmem:[#allocation17 + $0x78] sm:$0xff]
    %v1309 = vld [vmem:[#allocation17 + $0x80] sm:$0xff]
    %v1310 = vld [vmem:[#allocation17 + $0x88] sm:$0xff]
    %v1311 = vld [vmem:[#allocation17 + $0x90] sm:$0xff]
    %v1312 = vld [vmem:[#allocation17 + $0x98] sm:$0xff]
    %v1313 = vld [vmem:[#allocation17 + $0xa0] sm:$0xff]
    %v1314 = vld [vmem:[#allocation17 + $0xa8] sm:$0xff]
    %v1315 = vld [vmem:[#allocation17 + $0xb0] sm:$0xff]
    %v1316 = vld [vmem:[#allocation17 + $0xb8] sm:$0xff]
    %v1317 = vld [vmem:[#allocation17 + $0xc0] sm:$0xff]
    %v1318 = vld [vmem:[#allocation17 + $0xc8] sm:$0xff]
    %v1319 = vld [vmem:[#allocation17 + $0xd0] sm:$0xff]
    %v1320 = vld [vmem:[#allocation17 + $0xd8] sm:$0xff]
    %v1321 = vld [vmem:[#allocation17 + $0xe0] sm:$0xff]
    %v1322 = vld [vmem:[#allocation17 + $0xe8] sm:$0xff]
    %v1323 = vld [vmem:[#allocation17 + $0xf0] sm:$0xff]
    %v1324 = vld [vmem:[#allocation17 + $0xf8] sm:$0xff]
    %v1357 = vunpack.c.l.b16 %v1293
    %v1358 = vunpack.c.h.b16 %v1293
    %v1359 = vunpack.c.l.b16 %v1294
    %v1360 = vunpack.c.h.b16 %v1294
    %v1361 = vunpack.c.l.b16 %v1295
    %v1362 = vunpack.c.h.b16 %v1295
    %v1363 = vunpack.c.l.b16 %v1296
    %v1364 = vunpack.c.h.b16 %v1296
    %v1365 = vunpack.c.l.b16 %v1297
    %v1366 = vunpack.c.h.b16 %v1297
    %v1367 = vunpack.c.l.b16 %v1298
    %v1368 = vunpack.c.h.b16 %v1298
    %v1369 = vunpack.c.l.b16 %v1299
    %v1370 = vunpack.c.h.b16 %v1299
    %v1371 = vunpack.c.l.b16 %v1300
    %v1372 = vunpack.c.h.b16 %v1300
    %v1373 = vunpack.c.l.b16 %v1301
    %v1374 = vunpack.c.h.b16 %v1301
    %v1375 = vunpack.c.l.b16 %v1302
    %v1376 = vunpack.c.h.b16 %v1302
    %v1377 = vunpack.c.l.b16 %v1303
    %v1378 = vunpack.c.h.b16 %v1303
    %v1379 = vunpack.c.l.b16 %v1304
    %v1380 = vunpack.c.h.b16 %v1304
    %v1381 = vunpack.c.l.b16 %v1305
    %v1382 = vunpack.c.h.b16 %v1305
    %v1383 = vunpack.c.l.b16 %v1306
    %v1384 = vunpack.c.h.b16 %v1306
    %v1385 = vunpack.c.l.b16 %v1307
    %v1386 = vunpack.c.h.b16 %v1307
    %v1387 = vunpack.c.l.b16 %v1308
    %v1388 = vunpack.c.h.b16 %v1308
    %v1389 = vunpack.c.l.b16 %v1309
    %v1390 = vunpack.c.h.b16 %v1309
    %v1391 = vunpack.c.l.b16 %v1310
    %v1392 = vunpack.c.h.b16 %v1310
    %v1393 = vunpack.c.l.b16 %v1311
    %v1394 = vunpack.c.h.b16 %v1311
    %v1395 = vunpack.c.l.b16 %v1312
    %v1396 = vunpack.c.h.b16 %v1312
    %v1397 = vunpack.c.l.b16 %v1313
    %v1398 = vunpack.c.h.b16 %v1313
    %v1399 = vunpack.c.l.b16 %v1314
    %v1400 = vunpack.c.h.b16 %v1314
    %v1401 = vunpack.c.l.b16 %v1315
    %v1402 = vunpack.c.h.b16 %v1315
    %v1403 = vunpack.c.l.b16 %v1316
    %v1404 = vunpack.c.h.b16 %v1316
    %v1405 = vunpack.c.l.b16 %v1317
    %v1406 = vunpack.c.h.b16 %v1317
    %v1407 = vunpack.c.l.b16 %v1318
    %v1408 = vunpack.c.h.b16 %v1318
    %v1409 = vunpack.c.l.b16 %v1319
    %v1410 = vunpack.c.h.b16 %v1319
    %v1411 = vunpack.c.l.b16 %v1320
    %v1412 = vunpack.c.h.b16 %v1320
    %v1413 = vunpack.c.l.b16 %v1321
    %v1414 = vunpack.c.h.b16 %v1321
    %v1415 = vunpack.c.l.b16 %v1322
    %v1416 = vunpack.c.h.b16 %v1322
    %v1417 = vunpack.c.l.b16 %v1323
    %v1418 = vunpack.c.h.b16 %v1323
    %v1419 = vunpack.c.l.b16 %v1324
    %v1420 = vunpack.c.h.b16 %v1324
    %v1421 = vpack.c.b16 %v1361, %v1357
    %v1422 = vpack.c.b16 %v1362, %v1358
    %v1423 = vpack.c.b16 %v1363, %v1359
    %v1424 = vpack.c.b16 %v1364, %v1360
    %v1425 = vpack.c.b16 %v1369, %v1365
    %v1426 = vpack.c.b16 %v1370, %v1366
    %v1427 = vpack.c.b16 %v1371, %v1367
    %v1428 = vpack.c.b16 %v1372, %v1368
    %v1429 = vpack.c.b16 %v1377, %v1373
    %v1430 = vpack.c.b16 %v1378, %v1374
    %v1431 = vpack.c.b16 %v1379, %v1375
    %v1432 = vpack.c.b16 %v1380, %v1376
    %v1433 = vpack.c.b16 %v1385, %v1381
    %v1434 = vpack.c.b16 %v1386, %v1382
    %v1435 = vpack.c.b16 %v1387, %v1383
    %v1436 = vpack.c.b16 %v1388, %v1384
    %v1437 = vpack.c.b16 %v1393, %v1389
    %v1438 = vpack.c.b16 %v1394, %v1390
    %v1439 = vpack.c.b16 %v1395, %v1391
    %v1440 = vpack.c.b16 %v1396, %v1392
    %v1441 = vpack.c.b16 %v1401, %v1397
    %v1442 = vpack.c.b16 %v1402, %v1398
    %v1443 = vpack.c.b16 %v1403, %v1399
    %v1444 = vpack.c.b16 %v1404, %v1400
    %v1445 = vpack.c.b16 %v1409, %v1405
    %v1446 = vpack.c.b16 %v1410, %v1406
    %v1447 = vpack.c.b16 %v1411, %v1407
    %v1448 = vpack.c.b16 %v1412, %v1408
    %v1449 = vpack.c.b16 %v1417, %v1413
    %v1450 = vpack.c.b16 %v1418, %v1414
    %v1451 = vpack.c.b16 %v1419, %v1415
    %v1452 = vpack.c.b16 %v1420, %v1416
    %1485 = vmatpush.bf16.msra.mxu0 %v1449
    %1486 = vmatpush.bf16.msra.mxu0 %v1445
    %1487 = vmatpush.bf16.msra.mxu0 %v1441
    %1488 = vmatpush.bf16.msra.mxu0 %v1437
    %1489 = vmatpush.bf16.msra.mxu0 %v1433
    %1490 = vmatpush.bf16.msra.mxu0 %v1429
    %1491 = vmatpush.bf16.msra.mxu0 %v1425
    %1492 = vmatpush.bf16.msra.mxu0 %v1421
    %1493 = vmatmul.bf16.gmra.mxu0 %v1291
    %v1494 = vpop.f32.mrf.mxu0
    %v1495 = vadd.f32 0.0, %v1494
    %v1496 = vpop.f32.mrf.mxu0
    %v1497 = vadd.f32 0.0, %v1496
    %1498 = vmatmul.bf16.gmra.mxu0 %v1292
    %v1499 = vpop.f32.mrf.mxu0
    %v1500 = vadd.f32 0.0, %v1499
    %v1501 = vpop.f32.mrf.mxu0
    %v1502 = vadd.f32 0.0, %v1501
    %1503 = vdwg.mxu0
    %1504 = vmatpush.bf16.msra.mxu0 %v1450
    %1505 = vmatpush.bf16.msra.mxu0 %v1446
    %1506 = vmatpush.bf16.msra.mxu0 %v1442
    %1507 = vmatpush.bf16.msra.mxu0 %v1438
    %1508 = vmatpush.bf16.msra.mxu0 %v1434
    %1509 = vmatpush.bf16.msra.mxu0 %v1430
    %1510 = vmatpush.bf16.msra.mxu0 %v1426
    %1511 = vmatpush.bf16.msra.mxu0 %v1422
    %1512 = vmatmul.bf16.gmra.mxu0 %v1291
    %v1513 = vpop.f32.mrf.mxu0
    %v1514 = vadd.f32 0.0, %v1513
    %v1515 = vpop.f32.mrf.mxu0
    %v1516 = vadd.f32 0.0, %v1515
    %1517 = vmatmul.bf16.gmra.mxu0 %v1292
    %v1518 = vpop.f32.mrf.mxu0
    %v1519 = vadd.f32 0.0, %v1518
    %v1520 = vpop.f32.mrf.mxu0
    %v1521 = vadd.f32 0.0, %v1520
    %1522 = vdwg.mxu0
    %1523 = vmatpush.bf16.msra.mxu0 %v1451
    %1524 = vmatpush.bf16.msra.mxu0 %v1447
    %1525 = vmatpush.bf16.msra.mxu0 %v1443
    %1526 = vmatpush.bf16.msra.mxu0 %v1439
    %1527 = vmatpush.bf16.msra.mxu0 %v1435
    %1528 = vmatpush.bf16.msra.mxu0 %v1431
    %1529 = vmatpush.bf16.msra.mxu0 %v1427
    %1530 = vmatpush.bf16.msra.mxu0 %v1423
    %1531 = vmatmul.bf16.gmra.mxu0 %v1291
    %v1532 = vpop.f32.mrf.mxu0
    %v1533 = vadd.f32 0.0, %v1532
    %v1534 = vpop.f32.mrf.mxu0
    %v1535 = vadd.f32 0.0, %v1534
    %1536 = vmatmul.bf16.gmra.mxu0 %v1292
    %v1537 = vpop.f32.mrf.mxu0
    %v1538 = vadd.f32 0.0, %v1537
    %v1539 = vpop.f32.mrf.mxu0
    %v1540 = vadd.f32 0.0, %v1539
    %1541 = vdwg.mxu0
    %1542 = vmatpush.bf16.msra.mxu0 %v1452
    %1543 = vmatpush.bf16.msra.mxu0 %v1448
    %1544 = vmatpush.bf16.msra.mxu0 %v1444
    %1545 = vmatpush.bf16.msra.mxu0 %v1440
    %1546 = vmatpush.bf16.msra.mxu0 %v1436
    %1547 = vmatpush.bf16.msra.mxu0 %v1432
    %1548 = vmatpush.bf16.msra.mxu0 %v1428
    %1549 = vmatpush.bf16.msra.mxu0 %v1424
    %1550 = vmatmul.bf16.gmra.mxu0 %v1291
    %v1551 = vpop.f32.mrf.mxu0
    %v1552 = vadd.f32 0.0, %v1551
    %v1553 = vpop.f32.mrf.mxu0
    %v1554 = vadd.f32 0.0, %v1553
    %1555 = vmatmul.bf16.gmra.mxu0 %v1292
    %v1556 = vpop.f32.mrf.mxu0
    %v1557 = vadd.f32 0.0, %v1556
    %v1558 = vpop.f32.mrf.mxu0
    %v1559 = vadd.f32 0.0, %v1558
    %1560 = vdwg.mxu0
    %v1561 = vpack.c.bf16 %v1497, %v1495
    %v1562 = vpack.c.bf16 %v1502, %v1500
    %1563 = vmatpush.bf16.msra.mxu0 0
    %1564 = vmatpush.bf16.msra.mxu0 0
    %1565 = vmatpush.bf16.msra.mxu0 0
    %1566 = vmatpush.bf16.msra.mxu0 0
    %1567 = vmatpush.bf16.msra.mxu0 0
    %1568 = vmatpush.bf16.msra.mxu0 0
    %1569 = vmatpush.bf16.msra.mxu0 %v1562
    %1570 = vmatpush.bf16.msra.mxu0 %v1561
    %1571 = vmatmul.bf16.gmra.mxu0 %v422
    %v1572 = vpop.f32.mrf.mxu0
    %v1573 = vadd.f32 %v1514, %v1572
    %v1574 = vpop.f32.mrf.mxu0
    %v1575 = vadd.f32 %v1516, %v1574
    %1576 = vmatmul.bf16.gmra.mxu0 %v425
    %v1577 = vpop.f32.mrf.mxu0
    %v1578 = vadd.f32 %v1519, %v1577
    %v1579 = vpop.f32.mrf.mxu0
    %v1580 = vadd.f32 %v1521, %v1579
    %1581 = vdwg.mxu0
    %v1582 = vadd.f32 %v1573, %v747
    %v1583 = vadd.f32 %v1575, %v747
    %v1584 = vadd.f32 %v1578, %v747
    %v1585 = vadd.f32 %v1580, %v747
    %v1586 = vld [vmem:[#allocation20] sm:$0x3]
    %v1588 = vperm.slane %v1586, 0
    %v1589 = vperm.slane %v1586, 1
    %v1592 = vadd.f32 %v1533, %v1588
    %v1593 = vadd.f32 %v1552, %v1589
    %v1594 = vadd.f32 %v1535, %v1588
    %v1595 = vadd.f32 %v1554, %v1589
    %v1596 = vadd.f32 %v1538, %v1588
    %v1597 = vadd.f32 %v1557, %v1589
    %v1598 = vadd.f32 %v1540, %v1588
    %v1599 = vadd.f32 %v1559, %v1589
    %v1600 = vld [vmem:[#allocation19] sm:$0xf]
    %v1601 = vld [vmem:[#allocation19 + $0x4] sm:$0xf]
    %v1602 = vld [vmem:[#allocation19 + $0x8] sm:$0xf]
    %v1603 = vld [vmem:[#allocation19 + $0xc] sm:$0xf]
    %v1604 = vld [vmem:[#allocation19 + $0x10] sm:$0xf]
    %v1605 = vld [vmem:[#allocation19 + $0x14] sm:$0xf]
    %v1606 = vld [vmem:[#allocation19 + $0x18] sm:$0xf]
    %v1607 = vld [vmem:[#allocation19 + $0x1c] sm:$0xf]
    %v1608 = vld [vmem:[#allocation19 + $0x20] sm:$0xf]
    %v1609 = vld [vmem:[#allocation19 + $0x24] sm:$0xf]
    %v1610 = vld [vmem:[#allocation19 + $0x28] sm:$0xf]
    %v1611 = vld [vmem:[#allocation19 + $0x2c] sm:$0xf]
    %v1612 = vld [vmem:[#allocation19 + $0x30] sm:$0xf]
    %v1613 = vld [vmem:[#allocation19 + $0x34] sm:$0xf]
    %v1614 = vld [vmem:[#allocation19 + $0x38] sm:$0xf]
    %v1615 = vld [vmem:[#allocation19 + $0x3c] sm:$0xf]
    %v1632 = vunpack.c.l.b16 %v1600
    %v1633 = vunpack.c.l.b16 %v1601
    %v1634 = vunpack.c.l.b16 %v1602
    %v1635 = vunpack.c.l.b16 %v1603
    %v1636 = vunpack.c.l.b16 %v1604
    %v1637 = vunpack.c.l.b16 %v1605
    %v1638 = vunpack.c.l.b16 %v1606
    %v1639 = vunpack.c.l.b16 %v1607
    %v1640 = vunpack.c.l.b16 %v1608
    %v1641 = vunpack.c.l.b16 %v1609
    %v1642 = vunpack.c.l.b16 %v1610
    %v1643 = vunpack.c.l.b16 %v1611
    %v1644 = vunpack.c.l.b16 %v1612
    %v1645 = vunpack.c.l.b16 %v1613
    %v1646 = vunpack.c.l.b16 %v1614
    %v1647 = vunpack.c.l.b16 %v1615
    %v1648 = vpack.c.b16 %v1633, %v1632
    %v1649 = vpack.c.b16 %v1635, %v1634
    %v1650 = vpack.c.b16 %v1637, %v1636
    %v1651 = vpack.c.b16 %v1639, %v1638
    %v1652 = vpack.c.b16 %v1641, %v1640
    %v1653 = vpack.c.b16 %v1643, %v1642
    %v1654 = vpack.c.b16 %v1645, %v1644
    %v1655 = vpack.c.b16 %v1647, %v1646
    %1664 = vmatpush.bf16.msra.mxu0 %v1655
    %1665 = vmatpush.bf16.msra.mxu0 %v1654
    %1666 = vmatpush.bf16.msra.mxu0 %v1653
    %1667 = vmatpush.bf16.msra.mxu0 %v1652
    %1668 = vmatpush.bf16.msra.mxu0 %v1651
    %1669 = vmatpush.bf16.msra.mxu0 %v1650
    %1670 = vmatpush.bf16.msra.mxu0 %v1649
    %1671 = vmatpush.bf16.msra.mxu0 %v1648
    %1672 = vmatmul.bf16.gmra.mxu0 %v278
    %v1673 = vpop.f32.mrf.mxu0
    %v1674 = vadd.f32 0.0, %v1673
    %v1675 = vpop.f32.mrf.mxu0
    %v1676 = vadd.f32 0.0, %v1675
    %1677 = vmatmul.bf16.gmra.mxu0 %v279
    %v1678 = vpop.f32.mrf.mxu0
    %v1679 = vadd.f32 0.0, %v1678
    %v1680 = vpop.f32.mrf.mxu0
    %v1681 = vadd.f32 0.0, %v1680
    %1682 = vdwg.mxu0
    %v1683 = vadd.f32 %v1592, %v1674
    %v1684 = vadd.f32 %v1594, %v1676
    %v1685 = vadd.f32 %v1596, %v1679
    %v1686 = vadd.f32 %v1598, %v1681
    %v1687 = vpack.c.bf16 %v1583, %v1582
    %v1688 = vpack.c.bf16 %v1585, %v1584
    %1689 = vmatpush.bf16.xpose.msra.mxu0 0
    %1690 = vmatpush.bf16.xpose.msra.mxu0 0
    %1691 = vmatpush.bf16.xpose.msra.mxu0 0
    %1692 = vmatpush.bf16.xpose.msra.mxu0 0
    %1693 = vmatpush.bf16.xpose.msra.mxu0 0
    %1694 = vmatpush.bf16.xpose.msra.mxu0 0
    %1695 = vmatpush.bf16.xpose.msra.mxu0 %v1688
    %1696 = vmatpush.bf16.xpose.msra.mxu0 %v1687
    %1697 = vmatmul.bf16.gmra.mxu0 %v1687
    %v1698 = vpop.f32.mrf.mxu0
    %v1699 = vadd.f32 0.0, %v1698
    %v1700 = vpop.f32.mrf.mxu0
    %v1701 = vadd.f32 0.0, %v1700
    %1702 = vmatmul.bf16.gmra.mxu0 %v1688
    %v1703 = vpop.f32.mrf.mxu0
    %v1704 = vadd.f32 0.0, %v1703
    %v1705 = vpop.f32.mrf.mxu0
    %v1706 = vadd.f32 0.0, %v1705
    %1707 = vdwg.mxu0
    %v1708 = vsel %vm270, %v1699, -9e+15
    %v1709 = vsel %vm271, %v1701, -9e+15
    %v1710 = vsel %vm272, %v1704, -9e+15
    %v1711 = vsel %vm273, %v1706, -9e+15
    %v1712 = vadd.f32 %v929, %v1708
    %v1713 = vadd.f32 %v944, %v1709
    %v1714 = vadd.f32 %v959, %v1710
    %v1715 = vadd.f32 %v974, %v1711
    %v1716 = vsel %vm420, %v1712, -inf
    %1717 = vmax.xlane.f32.xlu0 %v1716
    %v1718 = vpop.xlane.xlu0 %1717
    %v1719 = vsel %vm420, %v1713, -inf
    %1720 = vmax.xlane.f32.xlu0 %v1719
    %v1721 = vpop.xlane.xlu0 %1720
    %v1722 = vsel %vm420, %v1714, -inf
    %1723 = vmax.xlane.f32.xlu0 %v1722
    %v1724 = vpop.xlane.xlu0 %1723
    %v1725 = vsel %vm420, %v1715, -inf
    %1726 = vmax.xlane.f32.xlu0 %v1725
    %v1727 = vpop.xlane.xlu0 %1726
    %v1728 = vsub.f32 %v1712, %v1718
    %v1729 = vsub.f32 %v1713, %v1721
    %v1730 = vsub.f32 %v1714, %v1724
    %v1731 = vsub.f32 %v1715, %v1727
    %v1732 = vmul.f32 %v1728, 1.442695
    %v1733 = vpow.pop %v1732
    %v1734 = vmul.f32 %v1729, 1.442695
    %v1735 = vpow.pop %v1734
    %v1736 = vmul.f32 %v1730, 1.442695
    %v1737 = vpow.pop %v1736
    %v1738 = vmul.f32 %v1731, 1.442695
    %v1739 = vpow.pop %v1738
    %v1740 = vsel %vm420, %v1733, 0.0
    %1741 = vadd.xlane.f32.xlu0 %v1740
    %v1742 = vpop.xlane.xlu0 %1741
    %v1743 = vsel %vm420, %v1735, 0.0
    %1744 = vadd.xlane.f32.xlu0 %v1743
    %v1745 = vpop.xlane.xlu0 %1744
    %v1746 = vsel %vm420, %v1737, 0.0
    %1747 = vadd.xlane.f32.xlu0 %v1746
    %v1748 = vpop.xlane.xlu0 %1747
    %v1749 = vsel %vm420, %v1739, 0.0
    %1750 = vadd.xlane.f32.xlu0 %v1749
    %v1751 = vpop.xlane.xlu0 %1750
    %v1752 = vrcp.pop %v1742
    %v1753 = vmul.f32 %v1742, %v1752
    %v1754 = vsub.f32 1.0, %v1753
    %v1755 = vmul.f32 %v1752, %v1754
    %v1756 = vadd.f32 %v1752, %v1755
    %vm1757 = vweird.f32 %v1742
    %vm1758 = vweird.f32 %v1752
    %vm1759 = vmor %vm1757, %vm1758
    %v1760 = vsel %vm1759, %v1752, %v1756
    %v1761 = vand.u32 2147483647, %v1742
    %vm1762 = vcmp.eq.f32.partialorder %v1761, 8.507059e+37
    %v1763 = vand.u32 %v1742, 2147483648
    %v1764 = vor.u32 1.1754944e-38, %v1763
    %v1765 = vsel %vm1762, %v1764, %v1760
    %v1766 = vmul.f32 %v1733, %v1765
    %v1767 = vrcp.pop %v1745
    %v1768 = vmul.f32 %v1745, %v1767
    %v1769 = vsub.f32 1.0, %v1768
    %v1770 = vmul.f32 %v1767, %v1769
    %v1771 = vadd.f32 %v1767, %v1770
    %vm1772 = vweird.f32 %v1745
    %vm1773 = vweird.f32 %v1767
    %vm1774 = vmor %vm1772, %vm1773
    %v1775 = vsel %vm1774, %v1767, %v1771
    %v1776 = vand.u32 2147483647, %v1745
    %vm1777 = vcmp.eq.f32.partialorder %v1776, 8.507059e+37
    %v1778 = vand.u32 %v1745, 2147483648
    %v1779 = vor.u32 1.1754944e-38, %v1778
    %v1780 = vsel %vm1777, %v1779, %v1775
    %v1781 = vmul.f32 %v1735, %v1780
    %v1782 = vrcp.pop %v1748
    %v1783 = vmul.f32 %v1748, %v1782
    %v1784 = vsub.f32 1.0, %v1783
    %v1785 = vmul.f32 %v1782, %v1784
    %v1786 = vadd.f32 %v1782, %v1785
    %vm1787 = vweird.f32 %v1748
    %vm1788 = vweird.f32 %v1782
    %vm1789 = vmor %vm1787, %vm1788
    %v1790 = vsel %vm1789, %v1782, %v1786
    %v1791 = vand.u32 2147483647, %v1748
    %vm1792 = vcmp.eq.f32.partialorder %v1791, 8.507059e+37
    %v1793 = vand.u32 %v1748, 2147483648
    %v1794 = vor.u32 1.1754944e-38, %v1793
    %v1795 = vsel %vm1792, %v1794, %v1790
    %v1796 = vmul.f32 %v1737, %v1795
    %v1797 = vrcp.pop %v1751
    %v1798 = vmul.f32 %v1751, %v1797
    %v1799 = vsub.f32 1.0, %v1798
    %v1800 = vmul.f32 %v1797, %v1799
    %v1801 = vadd.f32 %v1797, %v1800
    %vm1802 = vweird.f32 %v1751
    %vm1803 = vweird.f32 %v1797
    %vm1804 = vmor %vm1802, %vm1803
    %v1805 = vsel %vm1804, %v1797, %v1801
    %v1806 = vand.u32 2147483647, %v1751
    %vm1807 = vcmp.eq.f32.partialorder %v1806, 8.507059e+37
    %v1808 = vand.u32 %v1751, 2147483648
    %v1809 = vor.u32 1.1754944e-38, %v1808
    %v1810 = vsel %vm1807, %v1809, %v1805
    %v1811 = vmul.f32 %v1739, %v1810
    %v1812 = vpack.c.bf16 %v1684, %v1683
    %v1813 = vpack.c.bf16 %v1686, %v1685
    %v1814 = vpack.c.bf16 %v1595, %v1593
    %v1815 = vpack.c.bf16 %v1599, %v1597
    %1816 = vmatpush.bf16.xpose.msra.mxu0 0
    %1817 = vmatpush.bf16.xpose.msra.mxu0 0
    %1818 = vmatpush.bf16.xpose.msra.mxu0 0
    %1819 = vmatpush.bf16.xpose.msra.mxu0 0
    %1820 = vmatpush.bf16.xpose.msra.mxu0 0
    %1821 = vmatpush.bf16.xpose.msra.mxu0 0
    %1822 = vmatpush.bf16.xpose.msra.mxu0 %v1815
    %1823 = vmatpush.bf16.xpose.msra.mxu0 %v1814
    %1824 = vmatmul.bf16.gmra.mxu0 %v1812
    %v1825 = vpop.f32.mrf.mxu0
    %v1826 = vadd.f32 0.0, %v1825
    %v1827 = vpop.f32.mrf.mxu0
    %v1828 = vadd.f32 0.0, %v1827
    %1829 = vmatmul.bf16.gmra.mxu0 %v1813
    %v1830 = vpop.f32.mrf.mxu0
    %v1831 = vadd.f32 0.0, %v1830
    %v1832 = vpop.f32.mrf.mxu0
    %v1833 = vadd.f32 0.0, %v1832
    %1834 = vdwg.mxu0
    %v1835 = vmul.f32 %v1826, 0.17677669
    %v1836 = vmul.f32 %v1828, 0.17677669
    %v1837 = vmul.f32 %v1831, 0.17677669
    %v1838 = vmul.f32 %v1833, 0.17677669
    %vm1839 = vcmp.gt.f32.partialorder %v1122, 0.0
    %vm1840 = vcmp.gt.f32.partialorder %v1123, 0.0
    %vm1841 = vcmp.gt.f32.partialorder %v1124, 0.0
    %vm1842 = vcmp.gt.f32.partialorder %v1125, 0.0
    %v1843 = vsel %vm1839, -1e+09, %v1835
    %v1844 = vsel %vm1840, -1e+09, %v1836
    %v1845 = vsel %vm1841, -1e+09, %v1837
    %v1846 = vsel %vm1842, -1e+09, %v1838
    %v1847 = vsel %vm420, %v1843, -inf
    %1848 = vmax.xlane.f32.xlu0 %v1847
    %v1849 = vpop.xlane.xlu0 %1848
    %v1850 = vsel %vm420, %v1844, -inf
    %1851 = vmax.xlane.f32.xlu0 %v1850
    %v1852 = vpop.xlane.xlu0 %1851
    %v1853 = vsel %vm420, %v1845, -inf
    %1854 = vmax.xlane.f32.xlu0 %v1853
    %v1855 = vpop.xlane.xlu0 %1854
    %v1856 = vsel %vm420, %v1846, -inf
    %1857 = vmax.xlane.f32.xlu0 %v1856
    %v1858 = vpop.xlane.xlu0 %1857
    %v1859 = vsub.f32 %v1843, %v1849
    %v1860 = vsub.f32 %v1844, %v1852
    %v1861 = vsub.f32 %v1845, %v1855
    %v1862 = vsub.f32 %v1846, %v1858
    %v1863 = vmul.f32 %v1859, 1.442695
    %v1864 = vpow.pop %v1863
    %v1865 = vmul.f32 %v1860, 1.442695
    %v1866 = vpow.pop %v1865
    %v1867 = vmul.f32 %v1861, 1.442695
    %v1868 = vpow.pop %v1867
    %v1869 = vmul.f32 %v1862, 1.442695
    %v1870 = vpow.pop %v1869
    %v1871 = vsel %vm420, %v1864, 0.0
    %1872 = vadd.xlane.f32.xlu0 %v1871
    %v1873 = vpop.xlane.xlu0 %1872
    %v1874 = vsel %vm420, %v1866, 0.0
    %1875 = vadd.xlane.f32.xlu0 %v1874
    %v1876 = vpop.xlane.xlu0 %1875
    %v1877 = vsel %vm420, %v1868, 0.0
    %1878 = vadd.xlane.f32.xlu0 %v1877
    %v1879 = vpop.xlane.xlu0 %1878
    %v1880 = vsel %vm420, %v1870, 0.0
    %1881 = vadd.xlane.f32.xlu0 %v1880
    %v1882 = vpop.xlane.xlu0 %1881
    %v1883 = vrcp.pop %v1873
    %v1884 = vrcp.pop %v1876
    %v1885 = vrcp.pop %v1879
    %v1886 = vrcp.pop %v1882
    %v1887 = vmul.f32 %v1864, %v1883
    %v1888 = vmul.f32 %v1866, %v1884
    %v1889 = vmul.f32 %v1868, %v1885
    %v1890 = vmul.f32 %v1870, %v1886
    %v1891 = vpack.c.bf16 %v1888, %v1887
    %v1892 = vpack.c.bf16 %v1890, %v1889
    %v1894 = vsel %vm420, %v1891, 0
    %v1897 = vsel %vm420, %v1892, 0
    %1899 = vmatpush.bf16.msra.mxu0 0
    %1900 = vmatpush.bf16.msra.mxu0 0
    %1901 = vmatpush.bf16.msra.mxu0 0
    %1902 = vmatpush.bf16.msra.mxu0 0
    %1903 = vmatpush.bf16.msra.mxu0 0
    %1904 = vmatpush.bf16.msra.mxu0 0
    %1905 = vmatpush.bf16.msra.mxu0 %v1813
    %1906 = vmatpush.bf16.msra.mxu0 %v1812
    %1907 = vmatmul.bf16.gmra.mxu0 %v1894
    %v1908 = vpop.f32.mrf.mxu0
    %v1909 = vadd.f32 0.0, %v1908
    %v1910 = vpop.f32.mrf.mxu0
    %v1911 = vadd.f32 0.0, %v1910
    %1912 = vmatmul.bf16.gmra.mxu0 %v1897
    %v1913 = vpop.f32.mrf.mxu0
    %v1914 = vadd.f32 0.0, %v1913
    %v1915 = vpop.f32.mrf.mxu0
    %v1916 = vadd.f32 0.0, %v1915
    %1917 = vdwg.mxu0
    %v1918 = vadd.f32 %v1068, %v1909
    %v1919 = vadd.f32 %v1070, %v1911
    %v1920 = vadd.f32 %v1073, %v1914
    %v1921 = vadd.f32 %v1075, %v1916
    %v1922 = vmax.f32 %v1918, 0.0
    %v1923 = vmax.f32 %v1919, 0.0
    %v1924 = vmax.f32 %v1920, 0.0
    %v1925 = vmax.f32 %v1921, 0.0
    %v1926 = vrsqrt.pop %v1922
    %v1927 = vmul.f32 %v1926, %v1922
    %v1928 = vmul.f32 %v1927, %v1926
    %v1929 = vmul.f32 0.5, %v1928
    %v1930 = vsub.f32 1.5, %v1929
    %v1931 = vmul.f32 %v1926, %v1930
    %v1932 = vmul.f32 %v1922, %v1931
    %vm1933 = vcmp.eq.f32.partialorder %v1922, inf
    %v1934 = vsel %vm1933, %v1922, %v1932
    %vm1935 = vcmp.eq.f32.partialorder %v1922, 0.0
    %v1936 = vand.u32 %v1922, 2147483648
    %v1937 = vsel %vm1935, %v1936, %v1934
    %v1938 = vrsqrt.pop %v1923
    %v1939 = vmul.f32 %v1938, %v1923
    %v1940 = vmul.f32 %v1939, %v1938
    %v1941 = vmul.f32 0.5, %v1940
    %v1942 = vsub.f32 1.5, %v1941
    %v1943 = vmul.f32 %v1938, %v1942
    %v1944 = vmul.f32 %v1923, %v1943
    %vm1945 = vcmp.eq.f32.partialorder %v1923, inf
    %v1946 = vsel %vm1945, %v1923, %v1944
    %vm1947 = vcmp.eq.f32.partialorder %v1923, 0.0
    %v1948 = vand.u32 %v1923, 2147483648
    %v1949 = vsel %vm1947, %v1948, %v1946
    %v1950 = vrsqrt.pop %v1924
    %v1951 = vmul.f32 %v1950, %v1924
    %v1952 = vmul.f32 %v1951, %v1950
    %v1953 = vmul.f32 0.5, %v1952
    %v1954 = vsub.f32 1.5, %v1953
    %v1955 = vmul.f32 %v1950, %v1954
    %v1956 = vmul.f32 %v1924, %v1955
    %vm1957 = vcmp.eq.f32.partialorder %v1924, inf
    %v1958 = vsel %vm1957, %v1924, %v1956
    %vm1959 = vcmp.eq.f32.partialorder %v1924, 0.0
    %v1960 = vand.u32 %v1924, 2147483648
    %v1961 = vsel %vm1959, %v1960, %v1958
    %v1962 = vrsqrt.pop %v1925
    %v1963 = vmul.f32 %v1962, %v1925
    %v1964 = vmul.f32 %v1963, %v1962
    %v1965 = vmul.f32 0.5, %v1964
    %v1966 = vsub.f32 1.5, %v1965
    %v1967 = vmul.f32 %v1962, %v1966
    %v1968 = vmul.f32 %v1925, %v1967
    %vm1969 = vcmp.eq.f32.partialorder %v1925, inf
    %v1970 = vsel %vm1969, %v1925, %v1968
    %vm1971 = vcmp.eq.f32.partialorder %v1925, 0.0
    %v1972 = vand.u32 %v1925, 2147483648
    %v1973 = vsel %vm1971, %v1972, %v1970
    %v1974 = vsub.f32 0.0, %v1918
    %v1975 = vsub.f32 0.0, %v1919
    %v1976 = vsub.f32 0.0, %v1920
    %v1977 = vsub.f32 0.0, %v1921
    %v1978 = vmax.f32 %v1974, 0.0
    %v1979 = vmax.f32 %v1975, 0.0
    %v1980 = vmax.f32 %v1976, 0.0
    %v1981 = vmax.f32 %v1977, 0.0
    %v1982 = vrsqrt.pop %v1978
    %v1983 = vmul.f32 %v1982, %v1978
    %v1984 = vmul.f32 %v1983, %v1982
    %v1985 = vmul.f32 0.5, %v1984
    %v1986 = vsub.f32 1.5, %v1985
    %v1987 = vmul.f32 %v1982, %v1986
    %v1988 = vmul.f32 %v1978, %v1987
    %vm1989 = vcmp.eq.f32.partialorder %v1978, inf
    %v1990 = vsel %vm1989, %v1978, %v1988
    %vm1991 = vcmp.eq.f32.partialorder %v1978, 0.0
    %v1992 = vand.u32 %v1978, 2147483648
    %v1993 = vsel %vm1991, %v1992, %v1990
    %v1994 = vrsqrt.pop %v1979
    %v1995 = vmul.f32 %v1994, %v1979
    %v1996 = vmul.f32 %v1995, %v1994
    %v1997 = vmul.f32 0.5, %v1996
    %v1998 = vsub.f32 1.5, %v1997
    %v1999 = vmul.f32 %v1994, %v1998
    %v2000 = vmul.f32 %v1979, %v1999
    %vm2001 = vcmp.eq.f32.partialorder %v1979, inf
    %v2002 = vsel %vm2001, %v1979, %v2000
    %vm2003 = vcmp.eq.f32.partialorder %v1979, 0.0
    %v2004 = vand.u32 %v1979, 2147483648
    %v2005 = vsel %vm2003, %v2004, %v2002
    %v2006 = vrsqrt.pop %v1980
    %v2007 = vmul.f32 %v2006, %v1980
    %v2008 = vmul.f32 %v2007, %v2006
    %v2009 = vmul.f32 0.5, %v2008
    %v2010 = vsub.f32 1.5, %v2009
    %v2011 = vmul.f32 %v2006, %v2010
    %v2012 = vmul.f32 %v1980, %v2011
    %vm2013 = vcmp.eq.f32.partialorder %v1980, inf
    %v2014 = vsel %vm2013, %v1980, %v2012
    %vm2015 = vcmp.eq.f32.partialorder %v1980, 0.0
    %v2016 = vand.u32 %v1980, 2147483648
    %v2017 = vsel %vm2015, %v2016, %v2014
    %v2018 = vrsqrt.pop %v1981
    %v2019 = vmul.f32 %v2018, %v1981
    %v2020 = vmul.f32 %v2019, %v2018
    %v2021 = vmul.f32 0.5, %v2020
    %v2022 = vsub.f32 1.5, %v2021
    %v2023 = vmul.f32 %v2018, %v2022
    %v2024 = vmul.f32 %v1981, %v2023
    %vm2025 = vcmp.eq.f32.partialorder %v1981, inf
    %v2026 = vsel %vm2025, %v1981, %v2024
    %vm2027 = vcmp.eq.f32.partialorder %v1981, 0.0
    %v2028 = vand.u32 %v1981, 2147483648
    %v2029 = vsel %vm2027, %v2028, %v2026
    %v2030 = vsub.f32 %v1937, %v1993
    %v2031 = vsub.f32 %v1949, %v2005
    %v2032 = vsub.f32 %v1961, %v2017
    %v2033 = vsub.f32 %v1973, %v2029
    %v2034 = vmul.f32 %v2030, %v2030
    %v2035 = vmul.f32 %v2031, %v2031
    %v2036 = vmul.f32 %v2032, %v2032
    %v2037 = vmul.f32 %v2033, %v2033
    %2038 = vadd.xlane.f32.xlu0 %v2034
    %v2039 = vpop.xlane.xlu0 %2038
    %2040 = vadd.xlane.f32.xlu0 %v2035
    %v2041 = vpop.xlane.xlu0 %2040
    %2042 = vadd.xlane.f32.xlu0 %v2036
    %v2043 = vpop.xlane.xlu0 %2042
    %2044 = vadd.xlane.f32.xlu0 %v2037
    %v2045 = vpop.xlane.xlu0 %2044
    %v2046 = vmax.f32 %v2039, 1e-24
    %v2047 = vmax.f32 %v2041, 1e-24
    %v2048 = vmax.f32 %v2043, 1e-24
    %v2049 = vmax.f32 %v2045, 1e-24
    %v2050 = vrsqrt.pop %v2046
    %v2051 = vmul.f32 %v2050, %v2046
    %v2052 = vmul.f32 %v2051, %v2050
    %v2053 = vmul.f32 0.5, %v2052
    %v2054 = vsub.f32 1.5, %v2053
    %v2055 = vmul.f32 %v2050, %v2054
    %vm2056 = vweird.f32 %v2046
    %vm2057 = vweird.f32 %v2050
    %vm2058 = vmor %vm2056, %vm2057
    %v2059 = vsel %vm2058, %v2050, %v2055
    %v2060 = vrsqrt.pop %v2047
    %v2061 = vmul.f32 %v2060, %v2047
    %v2062 = vmul.f32 %v2061, %v2060
    %v2063 = vmul.f32 0.5, %v2062
    %v2064 = vsub.f32 1.5, %v2063
    %v2065 = vmul.f32 %v2060, %v2064
    %vm2066 = vweird.f32 %v2047
    %vm2067 = vweird.f32 %v2060
    %vm2068 = vmor %vm2066, %vm2067
    %v2069 = vsel %vm2068, %v2060, %v2065
    %v2070 = vrsqrt.pop %v2048
    %v2071 = vmul.f32 %v2070, %v2048
    %v2072 = vmul.f32 %v2071, %v2070
    %v2073 = vmul.f32 0.5, %v2072
    %v2074 = vsub.f32 1.5, %v2073
    %v2075 = vmul.f32 %v2070, %v2074
    %vm2076 = vweird.f32 %v2048
    %vm2077 = vweird.f32 %v2070
    %vm2078 = vmor %vm2076, %vm2077
    %v2079 = vsel %vm2078, %v2070, %v2075
    %v2080 = vrsqrt.pop %v2049
    %v2081 = vmul.f32 %v2080, %v2049
    %v2082 = vmul.f32 %v2081, %v2080
    %v2083 = vmul.f32 0.5, %v2082
    %v2084 = vsub.f32 1.5, %v2083
    %v2085 = vmul.f32 %v2080, %v2084
    %vm2086 = vweird.f32 %v2049
    %vm2087 = vweird.f32 %v2080
    %vm2088 = vmor %vm2086, %vm2087
    %v2089 = vsel %vm2088, %v2080, %v2085
    %v2090 = vmul.f32 %v2030, %v2059
    %v2091 = vmul.f32 %v2031, %v2069
    %v2092 = vmul.f32 %v2032, %v2079
    %v2093 = vmul.f32 %v2033, %v2089
    %v2094 = vadd.f32 %v2090, %v1287
    %v2095 = vadd.f32 %v2091, %v1288
    %v2096 = vadd.f32 %v2092, %v1289
    %v2097 = vadd.f32 %v2093, %v1290
    %v2098 = vld [vmem:[#allocation8] sm:$0xff]
    %v2099 = vld [vmem:[#allocation8 + $0x8] sm:$0xff]
    %v2100 = vld [vmem:[#allocation8 + $0x10] sm:$0xff]
    %v2101 = vld [vmem:[#allocation8 + $0x18] sm:$0xff]
    %v2102 = vld [vmem:[#allocation8 + $0x20] sm:$0xff]
    %v2103 = vld [vmem:[#allocation8 + $0x28] sm:$0xff]
    %v2104 = vld [vmem:[#allocation8 + $0x30] sm:$0xff]
    %v2105 = vld [vmem:[#allocation8 + $0x38] sm:$0xff]
    %v2106 = vld [vmem:[#allocation8 + $0x40] sm:$0xff]
    %v2107 = vld [vmem:[#allocation8 + $0x48] sm:$0xff]
    %v2108 = vld [vmem:[#allocation8 + $0x50] sm:$0xff]
    %v2109 = vld [vmem:[#allocation8 + $0x58] sm:$0xff]
    %v2110 = vld [vmem:[#allocation8 + $0x60] sm:$0xff]
    %v2111 = vld [vmem:[#allocation8 + $0x68] sm:$0xff]
    %v2112 = vld [vmem:[#allocation8 + $0x70] sm:$0xff]
    %v2113 = vld [vmem:[#allocation8 + $0x78] sm:$0xff]
    %v2130 = vunpack.c.l.b16 %v2098
    %v2131 = vunpack.c.h.b16 %v2098
    %v2132 = vunpack.c.l.b16 %v2099
    %v2133 = vunpack.c.h.b16 %v2099
    %v2134 = vunpack.c.l.b16 %v2100
    %v2135 = vunpack.c.h.b16 %v2100
    %v2136 = vunpack.c.l.b16 %v2101
    %v2137 = vunpack.c.h.b16 %v2101
    %v2138 = vunpack.c.l.b16 %v2102
    %v2139 = vunpack.c.h.b16 %v2102
    %v2140 = vunpack.c.l.b16 %v2103
    %v2141 = vunpack.c.h.b16 %v2103
    %v2142 = vunpack.c.l.b16 %v2104
    %v2143 = vunpack.c.h.b16 %v2104
    %v2144 = vunpack.c.l.b16 %v2105
    %v2145 = vunpack.c.h.b16 %v2105
    %v2146 = vunpack.c.l.b16 %v2106
    %v2147 = vunpack.c.h.b16 %v2106
    %v2148 = vunpack.c.l.b16 %v2107
    %v2149 = vunpack.c.h.b16 %v2107
    %v2150 = vunpack.c.l.b16 %v2108
    %v2151 = vunpack.c.h.b16 %v2108
    %v2152 = vunpack.c.l.b16 %v2109
    %v2153 = vunpack.c.h.b16 %v2109
    %v2154 = vunpack.c.l.b16 %v2110
    %v2155 = vunpack.c.h.b16 %v2110
    %v2156 = vunpack.c.l.b16 %v2111
    %v2157 = vunpack.c.h.b16 %v2111
    %v2158 = vunpack.c.l.b16 %v2112
    %v2159 = vunpack.c.h.b16 %v2112
    %v2160 = vunpack.c.l.b16 %v2113
    %v2161 = vunpack.c.h.b16 %v2113
    %v2162 = vpack.c.b16 %v2132, %v2130
    %v2163 = vpack.c.b16 %v2133, %v2131
    %v2164 = vpack.c.b16 %v2136, %v2134
    %v2165 = vpack.c.b16 %v2137, %v2135
    %v2166 = vpack.c.b16 %v2140, %v2138
    %v2167 = vpack.c.b16 %v2141, %v2139
    %v2168 = vpack.c.b16 %v2144, %v2142
    %v2169 = vpack.c.b16 %v2145, %v2143
    %v2170 = vpack.c.b16 %v2148, %v2146
    %v2171 = vpack.c.b16 %v2149, %v2147
    %v2172 = vpack.c.b16 %v2152, %v2150
    %v2173 = vpack.c.b16 %v2153, %v2151
    %v2174 = vpack.c.b16 %v2156, %v2154
    %v2175 = vpack.c.b16 %v2157, %v2155
    %v2176 = vpack.c.b16 %v2160, %v2158
    %v2177 = vpack.c.b16 %v2161, %v2159
    %2194 = vmatpush.bf16.msra.mxu0 %v2176
    %2195 = vmatpush.bf16.msra.mxu0 %v2174
    %2196 = vmatpush.bf16.msra.mxu0 %v2172
    %2197 = vmatpush.bf16.msra.mxu0 %v2170
    %2198 = vmatpush.bf16.msra.mxu0 %v2168
    %2199 = vmatpush.bf16.msra.mxu0 %v2166
    %2200 = vmatpush.bf16.msra.mxu0 %v2164
    %2201 = vmatpush.bf16.msra.mxu0 %v2162
    %2202 = vmatmul.bf16.gmra.mxu0 %v1291
    %v2203 = vpop.f32.mrf.mxu0
    %v2204 = vadd.f32 0.0, %v2203
    %v2205 = vpop.f32.mrf.mxu0
    %v2206 = vadd.f32 0.0, %v2205
    %2207 = vmatmul.bf16.gmra.mxu0 %v1292
    %v2208 = vpop.f32.mrf.mxu0
    %v2209 = vadd.f32 0.0, %v2208
    %v2210 = vpop.f32.mrf.mxu0
    %v2211 = vadd.f32 0.0, %v2210
    %2212 = vdwg.mxu0
    %2213 = vmatpush.bf16.msra.mxu0 %v2177
    %2214 = vmatpush.bf16.msra.mxu0 %v2175
    %2215 = vmatpush.bf16.msra.mxu0 %v2173
    %2216 = vmatpush.bf16.msra.mxu0 %v2171
    %2217 = vmatpush.bf16.msra.mxu0 %v2169
    %2218 = vmatpush.bf16.msra.mxu0 %v2167
    %2219 = vmatpush.bf16.msra.mxu0 %v2165
    %2220 = vmatpush.bf16.msra.mxu0 %v2163
    %2221 = vmatmul.bf16.gmra.mxu0 %v1291
    %v2222 = vpop.f32.mrf.mxu0
    %v2223 = vadd.f32 0.0, %v2222
    %v2224 = vpop.f32.mrf.mxu0
    %v2225 = vadd.f32 0.0, %v2224
    %2226 = vmatmul.bf16.gmra.mxu0 %v1292
    %v2227 = vpop.f32.mrf.mxu0
    %v2228 = vadd.f32 0.0, %v2227
    %v2229 = vpop.f32.mrf.mxu0
    %v2230 = vadd.f32 0.0, %v2229
    %2231 = vdwg.mxu0
    %v2232 = vpack.c.bf16 %v2206, %v2204
    %v2233 = vpack.c.bf16 %v2211, %v2209
    %2234 = vmatpush.bf16.msra.mxu0 0
    %2235 = vmatpush.bf16.msra.mxu0 0
    %2236 = vmatpush.bf16.msra.mxu0 0
    %2237 = vmatpush.bf16.msra.mxu0 0
    %2238 = vmatpush.bf16.msra.mxu0 0
    %2239 = vmatpush.bf16.msra.mxu0 0
    %2240 = vmatpush.bf16.msra.mxu0 %v2233
    %2241 = vmatpush.bf16.msra.mxu0 %v2232
    %2242 = vmatmul.bf16.gmra.mxu0 %v422
    %v2243 = vpop.f32.mrf.mxu0
    %v2244 = vadd.f32 %v2223, %v2243
    %v2245 = vpop.f32.mrf.mxu0
    %v2246 = vadd.f32 %v2225, %v2245
    %2247 = vmatmul.bf16.gmra.mxu0 %v425
    %v2248 = vpop.f32.mrf.mxu0
    %v2249 = vadd.f32 %v2228, %v2248
    %v2250 = vpop.f32.mrf.mxu0
    %v2251 = vadd.f32 %v2230, %v2250
    %2252 = vdwg.mxu0
    %v2253 = vld [vmem:[#allocation10] sm:$0x1]
    %v2255 = vperm.slane %v2253, 0
    %v2257 = vadd.f32 %v2244, %v2255
    %v2258 = vadd.f32 %v2246, %v2255
    %v2259 = vadd.f32 %v2249, %v2255
    %v2260 = vadd.f32 %v2251, %v2255
    %v2261 = vpack.c.bf16 %v2095, %v2094
    %v2262 = vpack.c.bf16 %v2097, %v2096
    %v2263 = vld [vmem:[#allocation11] sm:$0xff]
    %v2264 = vld [vmem:[#allocation11 + $0x8] sm:$0xff]
    %v2265 = vld [vmem:[#allocation11 + $0x10] sm:$0xff]
    %v2266 = vld [vmem:[#allocation11 + $0x18] sm:$0xff]
    %v2267 = vld [vmem:[#allocation11 + $0x20] sm:$0xff]
    %v2268 = vld [vmem:[#allocation11 + $0x28] sm:$0xff]
    %v2269 = vld [vmem:[#allocation11 + $0x30] sm:$0xff]
    %v2270 = vld [vmem:[#allocation11 + $0x38] sm:$0xff]
    %v2271 = vld [vmem:[#allocation11 + $0x40] sm:$0xff]
    %v2272 = vld [vmem:[#allocation11 + $0x48] sm:$0xff]
    %v2273 = vld [vmem:[#allocation11 + $0x50] sm:$0xff]
    %v2274 = vld [vmem:[#allocation11 + $0x58] sm:$0xff]
    %v2275 = vld [vmem:[#allocation11 + $0x60] sm:$0xff]
    %v2276 = vld [vmem:[#allocation11 + $0x68] sm:$0xff]
    %v2277 = vld [vmem:[#allocation11 + $0x70] sm:$0xff]
    %v2278 = vld [vmem:[#allocation11 + $0x78] sm:$0xff]
    %v2295 = vunpack.c.l.b16 %v2263
    %v2296 = vunpack.c.h.b16 %v2263
    %v2297 = vunpack.c.l.b16 %v2264
    %v2298 = vunpack.c.h.b16 %v2264
    %v2299 = vunpack.c.l.b16 %v2265
    %v2300 = vunpack.c.h.b16 %v2265
    %v2301 = vunpack.c.l.b16 %v2266
    %v2302 = vunpack.c.h.b16 %v2266
    %v2303 = vunpack.c.l.b16 %v2267
    %v2304 = vunpack.c.h.b16 %v2267
    %v2305 = vunpack.c.l.b16 %v2268
    %v2306 = vunpack.c.h.b16 %v2268
    %v2307 = vunpack.c.l.b16 %v2269
    %v2308 = vunpack.c.h.b16 %v2269
    %v2309 = vunpack.c.l.b16 %v2270
    %v2310 = vunpack.c.h.b16 %v2270
    %v2311 = vunpack.c.l.b16 %v2271
    %v2312 = vunpack.c.h.b16 %v2271
    %v2313 = vunpack.c.l.b16 %v2272
    %v2314 = vunpack.c.h.b16 %v2272
    %v2315 = vunpack.c.l.b16 %v2273
    %v2316 = vunpack.c.h.b16 %v2273
    %v2317 = vunpack.c.l.b16 %v2274
    %v2318 = vunpack.c.h.b16 %v2274
    %v2319 = vunpack.c.l.b16 %v2275
    %v2320 = vunpack.c.h.b16 %v2275
    %v2321 = vunpack.c.l.b16 %v2276
    %v2322 = vunpack.c.h.b16 %v2276
    %v2323 = vunpack.c.l.b16 %v2277
    %v2324 = vunpack.c.h.b16 %v2277
    %v2325 = vunpack.c.l.b16 %v2278
    %v2326 = vunpack.c.h.b16 %v2278
    %v2327 = vpack.c.b16 %v2297, %v2295
    %v2328 = vpack.c.b16 %v2298, %v2296
    %v2329 = vpack.c.b16 %v2301, %v2299
    %v2330 = vpack.c.b16 %v2302, %v2300
    %v2331 = vpack.c.b16 %v2305, %v2303
    %v2332 = vpack.c.b16 %v2306, %v2304
    %v2333 = vpack.c.b16 %v2309, %v2307
    %v2334 = vpack.c.b16 %v2310, %v2308
    %v2335 = vpack.c.b16 %v2313, %v2311
    %v2336 = vpack.c.b16 %v2314, %v2312
    %v2337 = vpack.c.b16 %v2317, %v2315
    %v2338 = vpack.c.b16 %v2318, %v2316
    %v2339 = vpack.c.b16 %v2321, %v2319
    %v2340 = vpack.c.b16 %v2322, %v2320
    %v2341 = vpack.c.b16 %v2325, %v2323
    %v2342 = vpack.c.b16 %v2326, %v2324
    %2359 = vmatpush.bf16.msra.mxu0 %v2341
    %2360 = vmatpush.bf16.msra.mxu0 %v2339
    %2361 = vmatpush.bf16.msra.mxu0 %v2337
    %2362 = vmatpush.bf16.msra.mxu0 %v2335
    %2363 = vmatpush.bf16.msra.mxu0 %v2333
    %2364 = vmatpush.bf16.msra.mxu0 %v2331
    %2365 = vmatpush.bf16.msra.mxu0 %v2329
    %2366 = vmatpush.bf16.msra.mxu0 %v2327
    %2367 = vmatmul.bf16.gmra.mxu0 %v2261
    %v2368 = vpop.f32.mrf.mxu0
    %v2369 = vadd.f32 0.0, %v2368
    %v2370 = vpop.f32.mrf.mxu0
    %v2371 = vadd.f32 0.0, %v2370
    %2372 = vmatmul.bf16.gmra.mxu0 %v2262
    %v2373 = vpop.f32.mrf.mxu0
    %v2374 = vadd.f32 0.0, %v2373
    %v2375 = vpop.f32.mrf.mxu0
    %v2376 = vadd.f32 0.0, %v2375
    %2377 = vdwg.mxu0
    %2378 = vmatpush.bf16.msra.mxu0 %v2342
    %2379 = vmatpush.bf16.msra.mxu0 %v2340
    %2380 = vmatpush.bf16.msra.mxu0 %v2338
    %2381 = vmatpush.bf16.msra.mxu0 %v2336
    %2382 = vmatpush.bf16.msra.mxu0 %v2334
    %2383 = vmatpush.bf16.msra.mxu0 %v2332
    %2384 = vmatpush.bf16.msra.mxu0 %v2330
    %2385 = vmatpush.bf16.msra.mxu0 %v2328
    %2386 = vmatmul.bf16.gmra.mxu0 %v2261
    %v2387 = vpop.f32.mrf.mxu0
    %v2388 = vadd.f32 0.0, %v2387
    %v2389 = vpop.f32.mrf.mxu0
    %v2390 = vadd.f32 0.0, %v2389
    %2391 = vmatmul.bf16.gmra.mxu0 %v2262
    %v2392 = vpop.f32.mrf.mxu0
    %v2393 = vadd.f32 0.0, %v2392
    %v2394 = vpop.f32.mrf.mxu0
    %v2395 = vadd.f32 0.0, %v2394
    %2396 = vdwg.mxu0
    %v2397 = vpack.c.bf16 %v2371, %v2369
    %v2398 = vpack.c.bf16 %v2376, %v2374
    %2399 = vmatpush.bf16.msra.mxu0 0
    %2400 = vmatpush.bf16.msra.mxu0 0
    %2401 = vmatpush.bf16.msra.mxu0 0
    %2402 = vmatpush.bf16.msra.mxu0 0
    %2403 = vmatpush.bf16.msra.mxu0 0
    %2404 = vmatpush.bf16.msra.mxu0 0
    %2405 = vmatpush.bf16.msra.mxu0 %v2398
    %2406 = vmatpush.bf16.msra.mxu0 %v2397
    %2407 = vmatmul.bf16.gmra.mxu0 %v422
    %v2408 = vpop.f32.mrf.mxu0
    %v2409 = vadd.f32 %v2388, %v2408
    %v2410 = vpop.f32.mrf.mxu0
    %v2411 = vadd.f32 %v2390, %v2410
    %2412 = vmatmul.bf16.gmra.mxu0 %v425
    %v2413 = vpop.f32.mrf.mxu0
    %v2414 = vadd.f32 %v2393, %v2413
    %v2415 = vpop.f32.mrf.mxu0
    %v2416 = vadd.f32 %v2395, %v2415
    %2417 = vdwg.mxu0
    %v2418 = vld [vmem:[#allocation13] sm:$0x1]
    %v2420 = vperm.slane %v2418, 0
    %v2422 = vadd.f32 %v2409, %v2420
    %v2423 = vadd.f32 %v2411, %v2420
    %v2424 = vadd.f32 %v2414, %v2420
    %v2425 = vadd.f32 %v2416, %v2420
    %v2426 = vlaneseq
    %v2427 = vand.u32 %v2426, 127
    %vm2428 = vcmp.lt.s32.totalorder %v2427, 8
    %v2429 = vsel %vm2428, %v2422, -1e+30
    %v2430 = vsel %vm2428, %v2423, -1e+30
    %v2431 = vsel %vm2428, %v2424, -1e+30
    %v2432 = vsel %vm2428, %v2425, -1e+30
    %2433 = vmax.xlane.f32.xlu0 %v2429
    %v2434 = vpop.xlane.xlu0 %2433
    %2435 = vmax.xlane.f32.xlu0 %v2430
    %v2436 = vpop.xlane.xlu0 %2435
    %2437 = vmax.xlane.f32.xlu0 %v2431
    %v2438 = vpop.xlane.xlu0 %2437
    %2439 = vmax.xlane.f32.xlu0 %v2432
    %v2440 = vpop.xlane.xlu0 %2439
    %v2441 = vsub.f32 %v2429, %v2434
    %v2442 = vsub.f32 %v2430, %v2436
    %v2443 = vsub.f32 %v2431, %v2438
    %v2444 = vsub.f32 %v2432, %v2440
    %v2445 = vmul.f32 %v2441, 1.442695
    %v2446 = vpow.pop %v2445
    %v2447 = vmul.f32 %v2442, 1.442695
    %v2448 = vpow.pop %v2447
    %v2449 = vmul.f32 %v2443, 1.442695
    %v2450 = vpow.pop %v2449
    %v2451 = vmul.f32 %v2444, 1.442695
    %v2452 = vpow.pop %v2451
    %2453 = vadd.xlane.f32.xlu0 %v2446
    %v2454 = vpop.xlane.xlu0 %2453
    %2455 = vadd.xlane.f32.xlu0 %v2448
    %v2456 = vpop.xlane.xlu0 %2455
    %2457 = vadd.xlane.f32.xlu0 %v2450
    %v2458 = vpop.xlane.xlu0 %2457
    %2459 = vadd.xlane.f32.xlu0 %v2452
    %v2460 = vpop.xlane.xlu0 %2459
    %v2461 = vlog2.pop %v2454
    %v2462 = vmul.f32 %v2461, 0.6931472
    %v2463 = vlog2.pop %v2456
    %v2464 = vmul.f32 %v2463, 0.6931472
    %v2465 = vlog2.pop %v2458
    %v2466 = vmul.f32 %v2465, 0.6931472
    %v2467 = vlog2.pop %v2460
    %v2468 = vmul.f32 %v2467, 0.6931472
    %v2469 = vadd.f32 %v2434, %v2462
    %v2470 = vadd.f32 %v2436, %v2464
    %v2471 = vadd.f32 %v2438, %v2466
    %v2472 = vadd.f32 %v2440, %v2468
    %v2473 = vsub.f32 %v2422, %v2469
    %v2474 = vsub.f32 %v2423, %v2470
    %v2475 = vsub.f32 %v2424, %v2471
    %v2476 = vsub.f32 %v2425, %v2472
    %v2477 = vrcp.pop 2.0
    %v2478 = vmul.f32 2.0, %v2477
    %v2479 = vsub.f32 1.0, %v2478
    %v2480 = vmul.f32 %v2477, %v2479
    %v2481 = vadd.f32 %v2477, %v2480
    %vm2482 = vweird.f32 %v2477
    %v2483 = vsel %vm2482, %v2477, %v2481
    %v2484 = vmul.f32 %v1766, %v2483
    %v2485 = vmul.f32 %v1781, %v2483
    %v2486 = vmul.f32 %v1796, %v2483
    %v2487 = vmul.f32 %v1811, %v2483
    %v2488 = vfloor.f32 %v2484
    %v2489 = vfloor.f32 %v2485
    %v2490 = vfloor.f32 %v2486
    %v2491 = vfloor.f32 %v2487
    %2492 = vst.msk [vmem:[#allocation25] sm:$0xff] %vm420, %v2488
    %2493 = vst.msk [vmem:[#allocation25 + $0x8] sm:$0xff] %vm420, %v2489
    %2494 = vst.msk [vmem:[#allocation25 + $0x10] sm:$0xff] %vm420, %v2490
    %2495 = vst.msk [vmem:[#allocation25 + $0x18] sm:$0xff] %vm420, %v2491
    %2496 = vst [vmem:[%s18] sm:$0xff] %v1582
    %2497 = vst [vmem:[%s18 + $0x18] sm:$0xff] %v1583
    %2498 = vst [vmem:[%s18 + $0x30] sm:$0xff] %v1584
    %2499 = vst [vmem:[%s18 + $0x48] sm:$0xff] %v1585
    %2500 = vst [vmem:[%s18 + $0x8] sm:$0xff] %v2257
    %2501 = vst [vmem:[%s18 + $0x20] sm:$0xff] %v2258
    %2502 = vst [vmem:[%s18 + $0x38] sm:$0xff] %v2259
    %2503 = vst [vmem:[%s18 + $0x50] sm:$0xff] %v2260
    %2504 = vst [vmem:[%s18 + $0x10] sm:$0xff] %v2473
    %2505 = vst [vmem:[%s18 + $0x28] sm:$0xff] %v2474
    %2506 = vst [vmem:[%s18 + $0x40] sm:$0xff] %v2475
    %2507 = vst [vmem:[%s18 + $0x58] sm:$0xff] %v2476
    // Predicated region
    $region126: #{forward.1} parent=1 // pred_check
      _
    $region127: #{forward.1} parent=1 // pred_check_branch
      %2509 = sbr.rel (0) target = $region129
    $region128: #{forward.1} parent=1 // pred_region
      %2511 = vsyncadd [#allocation4], 0
      %s2512 = sshll.u32 [#allocation25], 4
      %s2513 = int_to_ptr.vmem [resolvable:$true] %s2512
      %s2514 = sshll.u32 %s17, 4
      %s2515 = int_to_ptr.hbm [resolvable:$true] %s2514
      %2520 = dma.vmem_to_hbm [thread:$0]  %s2513, 512, %s2515, [#allocation4], 128, 128, 8
    $region129: #{forward.1} parent=1 // pred_fallthru
      _
    // Predicated region
    $region130: #{forward.1} parent=1 // pred_check
      _
    $region131: #{forward.1} parent=1 // pred_check_branch
      %2522 = sbr.rel (0) target = $region133
    $region132: #{forward.1} parent=1 // pred_region
      _
    $region133: #{forward.1} parent=1 // pred_fallthru
      _
    // Predicated region
    $region134: #{forward.1} parent=1 // pred_check
      _
    $region135: #{forward.1} parent=1 // pred_check_branch
      %2524 = sbr.rel (0) target = $region137
    $region136: #{forward.1} parent=1 // pred_region
      %2526 = dma.done [#allocation4], 512
    $region137: #{forward.1} parent=1 // pred_fallthru
      _
    // Predicated region
    $region138: #{forward.1} parent=1 // pred_check
      _
    $region139: #{forward.1} parent=1 // pred_check_branch
      %2528 = sbr.rel (0) target = $region141
    $region140: #{forward.1} parent=1 // pred_region
      _
    $region141: #{forward.1} parent=1 // pred_fallthru
      _
    %2529 = vsyncpa [#allocation3], 1
    %2530 = vsyncpa [#allocation6], 1
    %2531 = vsyncpa [#allocation9], 1
    %2532 = vsyncpa [#allocation12], 1
    %2533 = vsyncpa [#allocation15], 1
    %2534 = vsyncpa [#allocation18], 1
    %2535 = vsyncpa [#allocation21], 1
    %2536 = vsyncpa [#allocation24], 1
    %2537 = vsyncpa [#allocation4], 1

</llo_original>
